<compile_context>
chip_gen: v5e
topology: v5e:2x2
jax: 0.10.0
libtpu: 0.0.40
codegen_flags: <defaults>
</compile_context>

<pallas_src>
import numpy as np

import jax
import jax.numpy as jnp
from jax.experimental import pallas as pl
from jax.experimental.pallas import tpu as pltpu

# ---------------- configuration --------------------------------------------
CH = 4                      # input channels
DIMS = (8, 16, 16, 16)      # conv output channels
HW = 16                     # input spatial size (power of two)
LATENT = 32
BN_EPS = 1e-5
BOTTLENECK = DIMS[3] * (HW // 4) * (HW // 4)   # 16*4*4 = 256
_CONV_W_OUT = (16, 8, 4, 4)                    # output spatial width per conv
_HEAD_BLK = (HW // 4) * DIMS[3]                # 64 lanes per h row-group


# ---------------- in-kernel building blocks (trace-time helpers) -----------
def _lane_rollup(s, c_out):
    """Per-channel all-reduce over the w lane-groups.

    s: [1, n] with lane layout (w, c).  Returns [1, n] where every lane (w, c)
    holds sum_w s[w, c].  log2(n / c_out) circular lane shifts, written as
    explicit slice+concat so the shift direction is unambiguous.
    """
    n = s.shape[1]
    k = c_out
    while k < n:
        s = s + jnp.concatenate([s[:, k:], s[:, :k]], axis=1)
        k *= 2
    return s


def _conv_bn_act(x, pad_ref, w_ref, gb_ref, *, h_img, c_out, act):
    """3x3 stride-1 pad-1 conv + BatchNorm(batch stats) + activation.

    Layout: rows = (n, h), lanes = (w, c_in).  The dx taps (and, for the two
    post-pool layers, the 2x2-pool column selection) are folded into the band
    weight matrix, so the conv is just 3 matmuls, one per dy row shift.

    x       : [M, K]      M = nb*h_img, K = w_grid*c_in
    pad_ref : [M + 2, K]  VMEM staging for the +-1 row shifts (never zeroed:
                          every out-of-sample row is masked with jnp.where)
    w_ref   : [3*K, N]    N = w_out*c_out, dy-major band weights
    gb_ref  : [2, N]      gamma / beta pre-broadcast over w
    """
    m, kdim = x.shape
    n = w_ref.shape[1]
    pad_ref[pl.ds(1, m), :] = x
    # h index of each output row (h_img is a power of two -> bitwise AND).
    row_h = jax.lax.broadcasted_iota(jnp.int32, (m, kdim), 0) & (h_img - 1)

    acc = None
    for idx, dy in enumerate((-1, 0, 1)):
        shifted = pad_ref[pl.ds(1 + dy, m), :]
        if dy == -1:
            shifted = jnp.where(row_h >= 1, shifted, 0.0)
        elif dy == 1:
            shifted = jnp.where(row_h <= h_img - 2, shifted, 0.0)
        part = jnp.dot(shifted, w_ref[idx * kdim:(idx + 1) * kdim, :],
                       preferred_element_type=jnp.float32)
        acc = part if acc is None else acc + part

    # BatchNorm with batch statistics over (n, h, w), per output channel.
    w_out = n // c_out
    inv_cnt = 1.0 / float(m * w_out)
    s1 = _lane_rollup(jnp.sum(acc, axis=0, keepdims=True), c_out)
    s2 = _lane_rollup(jnp.sum(acc * acc, axis=0, keepdims=True), c_out)
    mean = s1 * inv_cnt
    var = jnp.maximum(s2 * inv_cnt - mean * mean, 0.0)   # clamp: no rsqrt NaN
    y = (acc - mean) * (gb_ref[0:1, :] * jax.lax.rsqrt(var + BN_EPS)) \
        + gb_ref[1:2, :]
    return jnp.maximum(y, 0.0) if act == "relu" else jnp.tanh(y)


def _maxpool2x2(y, pool_ref, c_blk):
    """2x2 stride-2 max-pool in the (n,h) x (w,c) layout.

    h direction: strided sublane loads pair rows.  w direction: compare with
    the next channel block (explicit lane shift).  Pooled values land on
    even-w lane blocks; odd-w blocks hold junk that the next layer's folded
    band weights multiply by zero rows.  Returns [M//2, N] (pre-pool w grid).
    """
    m, n = y.shape
    pool_ref[...] = y
    hmax = jnp.maximum(pool_ref[pl.ds(0, m // 2, 2), :],
                       pool_ref[pl.ds(1, m // 2, 2), :])
    nxt = jnp.concatenate([hmax[:, c_blk:], jnp.zeros_like(hmax[:, :c_blk])],
                          axis=1)
    return jnp.maximum(hmax, nxt)


# ---------------- the single fused kernel ----------------------------------
def _encoder_kernel(x_ref, w0_ref, gb0_ref, w1_ref, gb1_ref, w2_ref, gb2_ref,
                    w3_ref, gb3_ref, wh_ref, bh_ref,
                    out_ref,
                    s0, p0, s1, p1, s2, s3, a3):
    nb = out_ref.shape[0]

    # block 0: Conv(4->8)+BN+ReLU, 2x2 pool            16x16 -> 8x8
    y = _conv_bn_act(x_ref[...], s0, w0_ref, gb0_ref,
                     h_img=HW, c_out=DIMS[0], act="relu")
    y = _maxpool2x2(y, p0, DIMS[0])
    # block 1: Conv(8->16)+BN+ReLU, 2x2 pool             8x8 -> 4x4
    y = _conv_bn_act(y, s1, w1_ref, gb1_ref,
                     h_img=HW // 2, c_out=DIMS[1], act="relu")
    y = _maxpool2x2(y, p1, DIMS[1])
    # block 2: Conv(16->16)+BN+ReLU
    y = _conv_bn_act(y, s2, w2_ref, gb2_ref,
                     h_img=HW // 4, c_out=DIMS[2], act="relu")
    # block 3: Conv(16->16)+BN+Tanh
    y = _conv_bn_act(y, s3, w3_ref, gb3_ref,
                     h_img=HW // 4, c_out=DIMS[3], act="tanh")

    # Merged fc_mu|fc_var heads: weight rows are pre-permuted to this kernel's
    # (h, w, c) activation layout, so the conv output is consumed as-is via
    # 4 batch-wide matmuls (strided row gather over h).
    a3[...] = y
    acc = jnp.zeros((nb, 2 * LATENT), jnp.float32) + bh_ref[...]
    for hq in range(HW // 4):
        rows = a3[pl.ds(hq, nb, HW // 4), :]                     # [nb, 64]
        acc = acc + jnp.dot(rows,
                            wh_ref[hq * _HEAD_BLK:(hq + 1) * _HEAD_BLK, :],
                            preferred_element_type=jnp.float32)
    out_ref[...] = acc


# ---------------- host-side parameter construction -------------------------
def _band_weight_np(wt, w_out, cin, cout, in_grid_w, in_map):
    """dy-major band matrix [3*in_grid_w*cin, w_out*cout].

    Rows index the layer input lanes (w_grid, c_in) exactly as the kernel sees
    them; for layers fed by a 2x2 pool that is the *pre-pool* w grid, and the
    pool's column selection is folded in by only populating even-w rows.
    """
    big = np.zeros((3, in_grid_w * cin, w_out * cout), np.float32)
    for dyi in range(3):
        for g, u in in_map:                # g: input lane block, u: conv col
            for wo in range(w_out):
                dx = u - wo
                if -1 <= dx <= 1:
                    big[dyi, g * cin:(g + 1) * cin,
                        wo * cout:(wo + 1) * cout] = wt[:, :, dyi, dx + 1].T
    return big.reshape(3 * in_grid_w * cin, w_out * cout)


def make_params(key):
    """Synthetic torch-layout parameters + their kernel-layout repacking."""
    ks = jax.random.split(key, 12)
    cins = (CH,) + DIMS[:-1]

    tp = {}
    for li, (cin, cout) in enumerate(zip(cins, DIMS)):
        bound = 1.0 / float(np.sqrt(cin * 9))
        tp[f"c{li}"] = np.asarray(jax.random.uniform(
            ks[li], (cout, cin, 3, 3), jnp.float32, -bound, bound))
        tp[f"g{li}"] = np.ones((cout,), np.float32)    # BN gamma default
        tp[f"b{li}"] = np.zeros((cout,), np.float32)   # BN beta default
        # Conv bias not materialized: constant per-channel bias cancels under
        # the training-mode BatchNorm batch-mean subtraction.
    bound = 1.0 / float(np.sqrt(BOTTLENECK))
    tp["wmu"] = np.asarray(jax.random.uniform(
        ks[8], (LATENT, BOTTLENECK), jnp.float32, -bound, bound))
    tp["bmu"] = np.asarray(jax.random.uniform(
        ks[9], (LATENT,), jnp.float32, -bound, bound))
    tp["wvar"] = np.asarray(jax.random.uniform(
        ks[10], (LATENT, BOTTLENECK), jnp.float32, -bound, bound))
    tp["bvar"] = np.asarray(jax.random.uniform(
        ks[11], (LATENT,), jnp.float32, -bound, bound))

    kp = {}
    for li in range(4):
        cin, cout, wo = cins[li], DIMS[li], _CONV_W_OUT[li]
        if li in (1, 2):        # fed by a 2x2 pool: fold the column selection
            in_grid_w = 2 * wo
            in_map = [(2 * u, u) for u in range(wo)]
        else:
            in_grid_w = wo
            in_map = [(w, w) for w in range(wo)]
        kp[f"w{li}"] = jnp.asarray(
            _band_weight_np(tp[f"c{li}"], wo, cin, cout, in_grid_w, in_map))
        kp[f"gb{li}"] = jnp.asarray(np.stack(
            [np.tile(tp[f"g{li}"], wo), np.tile(tp[f"b{li}"], wo)], axis=0))

    # Merged fc_mu|fc_var: rows re-permuted from torch's (c, h, w) flatten
    # order to the kernel's (h, w, c) layout -> no transpose in-kernel.
    wm = np.concatenate([tp["wmu"], tp["wvar"]], axis=0)         # [2L, 256]
    kp["wh"] = jnp.asarray(
        wm.reshape(2 * LATENT, DIMS[3], HW // 4, HW // 4)
          .transpose(2, 3, 1, 0).reshape(BOTTLENECK, 2 * LATENT))
    kp["bh"] = jnp.asarray(np.concatenate(
        [tp["bmu"], tp["bvar"]], axis=0).reshape(1, 2 * LATENT))
    return kp, tp


# ---------------- full forward ----------------------------------------------
def _padded_f32_bytes(shape):
    rows = -(-shape[0] // 8) * 8
    cols = -(-shape[1] // 128) * 128
    return rows * cols * 4


@jax.jit
def crafter_encoder_forward(x_nchw, params):
    nb = x_nchw.shape[0]
    # NCHW -> rows (n, h), lanes (w, c): lane-dense activation layout.
    x = jnp.transpose(x_nchw, (0, 2, 3, 1)).reshape(nb * HW, HW * CH)

    operands = (x, params["w0"], params["gb0"], params["w1"], params["gb1"],
                params["w2"], params["gb2"], params["w3"], params["gb3"],
                params["wh"], params["bh"])

    scratch_dims = (
        (nb * HW + 2, HW * CH),                    # s0: conv0 row staging
        (nb * HW, HW * DIMS[0]),                   # p0: pool0 staging
        (nb * HW // 2 + 2, HW * DIMS[0]),          # s1: conv1 row staging
        (nb * HW // 2, (HW // 2) * DIMS[1]),       # p1: pool1 staging
        (nb * HW // 4 + 2, (HW // 2) * DIMS[1]),   # s2: conv2 row staging
        (nb * HW // 4 + 2, (HW // 4) * DIMS[2]),   # s3: conv3 row staging
        (nb * HW // 4, (HW // 4) * DIMS[3]),       # a3: head staging
    )
    scratch_shapes = [pltpu.VMEM(s, jnp.float32) for s in scratch_dims]

    # Explicit VMEM budget from the actual footprint (x2 for pipelining
    # buffers) plus generous headroom; well inside v7x's 64 MiB.
    vmem_bytes = (2 * sum(_padded_f32_bytes(op.shape) for op in operands)
                  + sum(_padded_f32_bytes(s) for s in scratch_dims)
                  + _padded_f32_bytes((nb, 2 * LATENT)) + (8 << 20))

    out = pl.pallas_call(
        _encoder_kernel,
        out_shape=jax.ShapeDtypeStruct((nb, 2 * LATENT), jnp.float32),
        grid=(1,),
        in_specs=[pl.BlockSpec(op.shape, lambda i: (0, 0)) for op in operands],
        out_specs=pl.BlockSpec((nb, 2 * LATENT), lambda i: (0, 0)),
        scratch_shapes=scratch_shapes,
        compiler_params=pltpu.CompilerParams(
            dimension_semantics=("arbitrary",),
            vmem_limit_bytes=int(vmem_bytes)),
    )(*operands)

    return out[:, :LATENT], out[:, LATENT:]


# ---------------- pure-JAX reference (for correctness check) ----------------
def _reference_forward(x, tp):
    def conv(h, w):
        return jax.lax.conv_general_dilated(
            h, jnp.asarray(w), (1, 1), ((1, 1), (1, 1)),
            dimension_numbers=("NCHW", "OIHW", "NCHW"))

    def bn(h, g, b):
        mean = jnp.mean(h, axis=(0, 2, 3), keepdims=True)
        var = jnp.mean(jnp.square(h - mean), axis=(0, 2, 3), keepdims=True)
        return ((h - mean) * jax.lax.rsqrt(var + BN_EPS)
                * jnp.asarray(g).reshape(1, -1, 1, 1)
                + jnp.asarray(b).reshape(1, -1, 1, 1))

    def pool(h):
        return jax.lax.reduce_window(h, -jnp.inf, jax.lax.max,
                                     (1, 1, 2, 2), (1, 1, 2, 2), "VALID")

    h = x
    h = jnp.maximum(pool(bn(conv(h, tp["c0"]), tp["g0"], tp["b0"])), 0.0)
    h = jnp.maximum(pool(bn(conv(h, tp["c1"]), tp["g1"], tp["b1"])), 0.0)
    h = jnp.maximum(bn(conv(h, tp["c2"]), tp["g2"], tp["b2"]), 0.0)
    h = jnp.tanh(bn(conv(h, tp["c3"]), tp["g3"], tp["b3"]))
    z = h.reshape(h.shape[0], -1)
    mu = z @ jnp.asarray(tp["wmu"]).T + jnp.asarray(tp["bmu"])
    log_var = z @ jnp.asarray(tp["wvar"]).T + jnp.asarray(tp["bvar"])
    return mu, log_var


# ---------------- main ------------------------------------------------------
if __name__ == "__main__":
    key = jax.random.PRNGKey(0)
    k_x, k_p = jax.random.split(key)

    x = jax.random.normal(k_x, (2, CH, HW, HW), dtype=jnp.float32)  # NCHW
    kparams, tparams = make_params(k_p)

    mu, log_var = crafter_encoder_forward(x, kparams)
    jax.block_until_ready((mu, log_var))

    assert mu.shape == (2, LATENT) and log_var.shape == (2, LATENT)
    assert bool(jnp.all(jnp.isfinite(mu)))
    assert bool(jnp.all(jnp.isfinite(log_var)))

    # Correctness against a plain-JAX reference (tolerance covers MXU f32
    # multi-pass vs XLA conv accumulation-order differences).
    with jax.default_matmul_precision("highest"):
        mu_ref, lv_ref = _reference_forward(x, tparams)
    np.testing.assert_allclose(np.asarray(mu), np.asarray(mu_ref),
                               rtol=1e-2, atol=1e-2)
    np.testing.assert_allclose(np.asarray(log_var), np.asarray(lv_ref),
                               rtol=1e-2, atol=1e-2)

    print("KERNEL_OK")
</pallas_src>

<mosaic_0001>
module attributes {stable_mosaic.version = 11 : i64} {
  func.func @_encoder_kernel(%arg0: i32, %arg1: memref<32x64xf32, #tpu.memory_space<vmem>>, %arg2: memref<192x128xf32, #tpu.memory_space<vmem>>, %arg3: memref<2x128xf32, #tpu.memory_space<vmem>>, %arg4: memref<384x128xf32, #tpu.memory_space<vmem>>, %arg5: memref<2x128xf32, #tpu.memory_space<vmem>>, %arg6: memref<384x64xf32, #tpu.memory_space<vmem>>, %arg7: memref<2x64xf32, #tpu.memory_space<vmem>>, %arg8: memref<192x64xf32, #tpu.memory_space<vmem>>, %arg9: memref<2x64xf32, #tpu.memory_space<vmem>>, %arg10: memref<256x64xf32, #tpu.memory_space<vmem>>, %arg11: memref<1x64xf32, #tpu.memory_space<vmem>>, %arg12: memref<2x64xf32, #tpu.memory_space<vmem>>, %arg13: memref<34x64xf32, #tpu.memory_space<vmem>>, %arg14: memref<32x128xf32, #tpu.memory_space<vmem>>, %arg15: memref<18x128xf32, #tpu.memory_space<vmem>>, %arg16: memref<16x128xf32, #tpu.memory_space<vmem>>, %arg17: memref<10x128xf32, #tpu.memory_space<vmem>>, %arg18: memref<10x64xf32, #tpu.memory_space<vmem>>, %arg19: memref<8x64xf32, #tpu.memory_space<vmem>>) attributes {dimension_semantics = [#tpu.dimension_semantics<arbitrary>], iteration_bounds = array<i64: 1>, scalar_prefetch = 0 : i64, scratch_operands = 7 : i64, tpu.core_type = #tpu.core_type<tc>, window_params = [{pipeline_mode = #tpu.pipeline_mode<synchronous>, transform_indices = @transform_0, window_bounds = array<i64: 32, 64>}, {pipeline_mode = #tpu.pipeline_mode<synchronous>, transform_indices = @transform_1, window_bounds = array<i64: 192, 128>}, {pipeline_mode = #tpu.pipeline_mode<synchronous>, transform_indices = @transform_2, window_bounds = array<i64: 2, 128>}, {pipeline_mode = #tpu.pipeline_mode<synchronous>, transform_indices = @transform_3, window_bounds = array<i64: 384, 128>}, {pipeline_mode = #tpu.pipeline_mode<synchronous>, transform_indices = @transform_4, window_bounds = array<i64: 2, 128>}, {pipeline_mode = #tpu.pipeline_mode<synchronous>, transform_indices = @transform_5, window_bounds = array<i64: 384, 64>}, {pipeline_mode = #tpu.pipeline_mode<synchronous>, transform_indices = @transform_6, window_bounds = array<i64: 2, 64>}, {pipeline_mode = #tpu.pipeline_mode<synchronous>, transform_indices = @transform_7, window_bounds = array<i64: 192, 64>}, {pipeline_mode = #tpu.pipeline_mode<synchronous>, transform_indices = @transform_8, window_bounds = array<i64: 2, 64>}, {pipeline_mode = #tpu.pipeline_mode<synchronous>, transform_indices = @transform_9, window_bounds = array<i64: 256, 64>}, {pipeline_mode = #tpu.pipeline_mode<synchronous>, transform_indices = @transform_10, window_bounds = array<i64: 1, 64>}, {pipeline_mode = #tpu.pipeline_mode<synchronous>, transform_indices = @transform_11, window_bounds = array<i64: 2, 64>}]} {
    %c0 = arith.constant 0 : index
    %c0_0 = arith.constant 0 : index
    %0 = vector.load %arg1[%c0, %c0_0] : memref<32x64xf32, #tpu.memory_space<vmem>>, vector<32x64xf32>
    %c1 = arith.constant 1 : index
    %c0_1 = arith.constant 0 : index
    %1 = vector.load %arg13[%c1, %c0_1] : memref<34x64xf32, #tpu.memory_space<vmem>>, vector<32x64xf32>
    tpu.vector_store %arg13[%c1, %c0_1], %0 {strides = array<i32>} : memref<34x64xf32, #tpu.memory_space<vmem>>, vector<32x64xf32>,
    %2 = tpu.iota {dimensions = array<i32: 0>} : vector<32x64xi32>
    %c15_i32 = arith.constant 15 : i32
    %3 = vector.broadcast %c15_i32 : i32 to vector<32x64xi32>
    %4 = arith.andi %2, %3 : vector<32x64xi32>
    %c0_2 = arith.constant 0 : index
    %c0_3 = arith.constant 0 : index
    %5 = vector.load %arg13[%c0_2, %c0_3] : memref<34x64xf32, #tpu.memory_space<vmem>>, vector<32x64xf32>
    %c1_i32 = arith.constant 1 : i32
    %6 = vector.broadcast %c1_i32 : i32 to vector<32x64xi32>
    %7 = arith.cmpi sge, %4, %6 : vector<32x64xi32>
    %cst = arith.constant 0.000000e+00 : f32
    %8 = vector.broadcast %cst : f32 to vector<32x64xf32>
    %9 = arith.select %7, %5, %8 : vector<32x64xi1>, vector<32x64xf32>
    %c0_4 = arith.constant 0 : index
    %c0_5 = arith.constant 0 : index
    %10 = vector.load %arg2[%c0_4, %c0_5] : memref<192x128xf32, #tpu.memory_space<vmem>>, vector<64x128xf32>
    %cst_6 = arith.constant dense<0.000000e+00> : vector<32x128xf32>
    %11 = tpu.matmul %9, %10, %cst_6 {dimension_numbers = #tpu.dot_dimension_numbers<[1], [0], [0], [1], [0, 0, 1, 1], [], []>} : vector<32x64xf32>, vector<64x128xf32>, vector<32x128xf32> -> vector<32x128xf32>
    %c1_7 = arith.constant 1 : index
    %c0_8 = arith.constant 0 : index
    %12 = vector.load %arg13[%c1_7, %c0_8] : memref<34x64xf32, #tpu.memory_space<vmem>>, vector<32x64xf32>
    %c64 = arith.constant 64 : index
    %c0_9 = arith.constant 0 : index
    %13 = vector.load %arg2[%c64, %c0_9] : memref<192x128xf32, #tpu.memory_space<vmem>>, vector<64x128xf32>
    %cst_10 = arith.constant dense<0.000000e+00> : vector<32x128xf32>
    %14 = tpu.matmul %12, %13, %cst_10 {dimension_numbers = #tpu.dot_dimension_numbers<[1], [0], [0], [1], [0, 0, 1, 1], [], []>} : vector<32x64xf32>, vector<64x128xf32>, vector<32x128xf32> -> vector<32x128xf32>
    %15 = arith.addf %11, %14 : vector<32x128xf32>
    %c2 = arith.constant 2 : index
    %c0_11 = arith.constant 0 : index
    %16 = vector.load %arg13[%c2, %c0_11] : memref<34x64xf32, #tpu.memory_space<vmem>>, vector<32x64xf32>
    %c14_i32 = arith.constant 14 : i32
    %17 = vector.broadcast %c14_i32 : i32 to vector<32x64xi32>
    %18 = arith.cmpi sle, %4, %17 : vector<32x64xi32>
    %cst_12 = arith.constant 0.000000e+00 : f32
    %19 = vector.broadcast %cst_12 : f32 to vector<32x64xf32>
    %20 = arith.select %18, %16, %19 : vector<32x64xi1>, vector<32x64xf32>
    %c128 = arith.constant 128 : index
    %c0_13 = arith.constant 0 : index
    %21 = vector.load %arg2[%c128, %c0_13] : memref<192x128xf32, #tpu.memory_space<vmem>>, vector<64x128xf32>
    %cst_14 = arith.constant dense<0.000000e+00> : vector<32x128xf32>
    %22 = tpu.matmul %20, %21, %cst_14 {dimension_numbers = #tpu.dot_dimension_numbers<[1], [0], [0], [1], [0, 0, 1, 1], [], []>} : vector<32x64xf32>, vector<64x128xf32>, vector<32x128xf32> -> vector<32x128xf32>
    %23 = arith.addf %15, %22 : vector<32x128xf32>
    %cst_15 = arith.constant dense<0.000000e+00> : vector<128xf32>
    %24 = vector.multi_reduction <add>, %23, %cst_15 [0] : vector<32x128xf32> to vector<128xf32>
    %25 = vector.shape_cast %24 : vector<128xf32> to vector<1x128xf32>
    %26 = vector.extract_strided_slice %25 {offsets = [0, 8], sizes = [1, 120], strides = [1, 1]} : vector<1x128xf32> to vector<1x120xf32>
    %27 = vector.extract_strided_slice %25 {offsets = [0, 0], sizes = [1, 8], strides = [1, 1]} : vector<1x128xf32> to vector<1x8xf32>
    %28 = tpu.concatenate %26, %27 in 1 : vector<1x120xf32>, vector<1x8xf32> -> vector<1x128xf32>
    %29 = arith.addf %25, %28 : vector<1x128xf32>
    %30 = vector.extract_strided_slice %29 {offsets = [0, 16], sizes = [1, 112], strides = [1, 1]} : vector<1x128xf32> to vector<1x112xf32>
    %31 = vector.extract_strided_slice %29 {offsets = [0, 0], sizes = [1, 16], strides = [1, 1]} : vector<1x128xf32> to vector<1x16xf32>
    %32 = tpu.concatenate %30, %31 in 1 : vector<1x112xf32>, vector<1x16xf32> -> vector<1x128xf32>
    %33 = arith.addf %29, %32 : vector<1x128xf32>
    %34 = vector.extract_strided_slice %33 {offsets = [0, 32], sizes = [1, 96], strides = [1, 1]} : vector<1x128xf32> to vector<1x96xf32>
    %35 = vector.extract_strided_slice %33 {offsets = [0, 0], sizes = [1, 32], strides = [1, 1]} : vector<1x128xf32> to vector<1x32xf32>
    %36 = tpu.concatenate %34, %35 in 1 : vector<1x96xf32>, vector<1x32xf32> -> vector<1x128xf32>
    %37 = arith.addf %33, %36 : vector<1x128xf32>
    %38 = vector.extract_strided_slice %37 {offsets = [0, 64], sizes = [1, 64], strides = [1, 1]} : vector<1x128xf32> to vector<1x64xf32>
    %39 = vector.extract_strided_slice %37 {offsets = [0, 0], sizes = [1, 64], strides = [1, 1]} : vector<1x128xf32> to vector<1x64xf32>
    %40 = tpu.concatenate %38, %39 in 1 : vector<1x64xf32>, vector<1x64xf32> -> vector<1x128xf32>
    %41 = arith.addf %37, %40 : vector<1x128xf32>
    %42 = arith.mulf %23, %23 : vector<32x128xf32>
    %cst_16 = arith.constant dense<0.000000e+00> : vector<128xf32>
    %43 = vector.multi_reduction <add>, %42, %cst_16 [0] : vector<32x128xf32> to vector<128xf32>
    %44 = vector.shape_cast %43 : vector<128xf32> to vector<1x128xf32>
    %45 = vector.extract_strided_slice %44 {offsets = [0, 8], sizes = [1, 120], strides = [1, 1]} : vector<1x128xf32> to vector<1x120xf32>
    %46 = vector.extract_strided_slice %44 {offsets = [0, 0], sizes = [1, 8], strides = [1, 1]} : vector<1x128xf32> to vector<1x8xf32>
    %47 = tpu.concatenate %45, %46 in 1 : vector<1x120xf32>, vector<1x8xf32> -> vector<1x128xf32>
    %48 = arith.addf %44, %47 : vector<1x128xf32>
    %49 = vector.extract_strided_slice %48 {offsets = [0, 16], sizes = [1, 112], strides = [1, 1]} : vector<1x128xf32> to vector<1x112xf32>
    %50 = vector.extract_strided_slice %48 {offsets = [0, 0], sizes = [1, 16], strides = [1, 1]} : vector<1x128xf32> to vector<1x16xf32>
    %51 = tpu.concatenate %49, %50 in 1 : vector<1x112xf32>, vector<1x16xf32> -> vector<1x128xf32>
    %52 = arith.addf %48, %51 : vector<1x128xf32>
    %53 = vector.extract_strided_slice %52 {offsets = [0, 32], sizes = [1, 96], strides = [1, 1]} : vector<1x128xf32> to vector<1x96xf32>
    %54 = vector.extract_strided_slice %52 {offsets = [0, 0], sizes = [1, 32], strides = [1, 1]} : vector<1x128xf32> to vector<1x32xf32>
    %55 = tpu.concatenate %53, %54 in 1 : vector<1x96xf32>, vector<1x32xf32> -> vector<1x128xf32>
    %56 = arith.addf %52, %55 : vector<1x128xf32>
    %57 = vector.extract_strided_slice %56 {offsets = [0, 64], sizes = [1, 64], strides = [1, 1]} : vector<1x128xf32> to vector<1x64xf32>
    %58 = vector.extract_strided_slice %56 {offsets = [0, 0], sizes = [1, 64], strides = [1, 1]} : vector<1x128xf32> to vector<1x64xf32>
    %59 = tpu.concatenate %57, %58 in 1 : vector<1x64xf32>, vector<1x64xf32> -> vector<1x128xf32>
    %60 = arith.addf %56, %59 : vector<1x128xf32>
    %cst_17 = arith.constant 0.001953125 : f32
    %61 = vector.broadcast %cst_17 : f32 to vector<1x128xf32>
    %62 = arith.mulf %41, %61 : vector<1x128xf32>
    %cst_18 = arith.constant 0.001953125 : f32
    %63 = vector.broadcast %cst_18 : f32 to vector<1x128xf32>
    %64 = arith.mulf %60, %63 : vector<1x128xf32>
    %65 = arith.mulf %62, %62 : vector<1x128xf32>
    %66 = arith.subf %64, %65 : vector<1x128xf32>
    %cst_19 = arith.constant 0.000000e+00 : f32
    %67 = vector.broadcast %cst_19 : f32 to vector<1x128xf32>
    %68 = arith.maximumf %66, %67 : vector<1x128xf32>
    %69 = vector.broadcast %62 : vector<1x128xf32> to vector<32x128xf32>
    %70 = arith.subf %23, %69 : vector<32x128xf32>
    %c0_20 = arith.constant 0 : index
    %c0_21 = arith.constant 0 : index
    %71 = vector.load %arg3[%c0_20, %c0_21] : memref<2x128xf32, #tpu.memory_space<vmem>>, vector<1x128xf32>
    %cst_22 = arith.constant 9.99999974E-6 : f32
    %72 = vector.broadcast %cst_22 : f32 to vector<1x128xf32>
    %73 = arith.addf %68, %72 : vector<1x128xf32>
    %74 = math.rsqrt %73 : vector<1x128xf32>
    %75 = arith.mulf %71, %74 : vector<1x128xf32>
    %76 = vector.broadcast %75 : vector<1x128xf32> to vector<32x128xf32>
    %77 = arith.mulf %70, %76 : vector<32x128xf32>
    %c1_23 = arith.constant 1 : index
    %c0_24 = arith.constant 0 : index
    %78 = vector.load %arg3[%c1_23, %c0_24] : memref<2x128xf32, #tpu.memory_space<vmem>>, vector<1x128xf32>
    %79 = vector.broadcast %78 : vector<1x128xf32> to vector<32x128xf32>
    %80 = arith.addf %77, %79 : vector<32x128xf32>
    %cst_25 = arith.constant 0.000000e+00 : f32
    %81 = vector.broadcast %cst_25 : f32 to vector<32x128xf32>
    %82 = arith.maximumf %80, %81 : vector<32x128xf32>
    %c0_26 = arith.constant 0 : index
    %c0_27 = arith.constant 0 : index
    %83 = vector.load %arg14[%c0_26, %c0_27] : memref<32x128xf32, #tpu.memory_space<vmem>>, vector<32x128xf32>
    tpu.vector_store %arg14[%c0_26, %c0_27], %82 {strides = array<i32>} : memref<32x128xf32, #tpu.memory_space<vmem>>, vector<32x128xf32>,
    %c0_28 = arith.constant 0 : index
    %c0_29 = arith.constant 0 : index
    %84 = tpu.strided_load %arg14[%c0_28, %c0_29] {strides = array<i32: 2, 1>} : memref<32x128xf32, #tpu.memory_space<vmem>>, vector<16x128xf32>
    %c1_30 = arith.constant 1 : index
    %c0_31 = arith.constant 0 : index
    %85 = tpu.strided_load %arg14[%c1_30, %c0_31] {strides = array<i32: 2, 1>} : memref<32x128xf32, #tpu.memory_space<vmem>>, vector<16x128xf32>
    %86 = arith.maximumf %84, %85 : vector<16x128xf32>
    %87 = vector.extract_strided_slice %86 {offsets = [0, 8], sizes = [16, 120], strides = [1, 1]} : vector<16x128xf32> to vector<16x120xf32>
    %cst_32 = arith.constant 0.000000e+00 : f32
    %88 = vector.broadcast %cst_32 : f32 to vector<16x8xf32>
    %89 = tpu.concatenate %87, %88 in 1 : vector<16x120xf32>, vector<16x8xf32> -> vector<16x128xf32>
    %90 = arith.maximumf %86, %89 : vector<16x128xf32>
    %c1_33 = arith.constant 1 : index
    %c0_34 = arith.constant 0 : index
    %91 = vector.load %arg15[%c1_33, %c0_34] : memref<18x128xf32, #tpu.memory_space<vmem>>, vector<16x128xf32>
    tpu.vector_store %arg15[%c1_33, %c0_34], %90 {strides = array<i32>} : memref<18x128xf32, #tpu.memory_space<vmem>>, vector<16x128xf32>,
    %92 = tpu.iota {dimensions = array<i32: 0>} : vector<16x128xi32>
    %c7_i32 = arith.constant 7 : i32
    %93 = vector.broadcast %c7_i32 : i32 to vector<16x128xi32>
    %94 = arith.andi %92, %93 : vector<16x128xi32>
    %c0_35 = arith.constant 0 : index
    %c0_36 = arith.constant 0 : index
    %95 = vector.load %arg15[%c0_35, %c0_36] : memref<18x128xf32, #tpu.memory_space<vmem>>, vector<16x128xf32>
    %c1_i32_37 = arith.constant 1 : i32
    %96 = vector.broadcast %c1_i32_37 : i32 to vector<16x128xi32>
    %97 = arith.cmpi sge, %94, %96 : vector<16x128xi32>
    %cst_38 = arith.constant 0.000000e+00 : f32
    %98 = vector.broadcast %cst_38 : f32 to vector<16x128xf32>
    %99 = arith.select %97, %95, %98 : vector<16x128xi1>, vector<16x128xf32>
    %c0_39 = arith.constant 0 : index
    %c0_40 = arith.constant 0 : index
    %100 = vector.load %arg4[%c0_39, %c0_40] : memref<384x128xf32, #tpu.memory_space<vmem>>, vector<128x128xf32>
    %cst_41 = arith.constant dense<0.000000e+00> : vector<16x128xf32>
    %101 = tpu.matmul %99, %100, %cst_41 {dimension_numbers = #tpu.dot_dimension_numbers<[1], [0], [0], [1], [0, 0, 1, 1], [], []>} : vector<16x128xf32>, vector<128x128xf32>, vector<16x128xf32> -> vector<16x128xf32>
    %c1_42 = arith.constant 1 : index
    %c0_43 = arith.constant 0 : index
    %102 = vector.load %arg15[%c1_42, %c0_43] : memref<18x128xf32, #tpu.memory_space<vmem>>, vector<16x128xf32>
    %c128_44 = arith.constant 128 : index
    %c0_45 = arith.constant 0 : index
    %103 = vector.load %arg4[%c128_44, %c0_45] : memref<384x128xf32, #tpu.memory_space<vmem>>, vector<128x128xf32>
    %cst_46 = arith.constant dense<0.000000e+00> : vector<16x128xf32>
    %104 = tpu.matmul %102, %103, %cst_46 {dimension_numbers = #tpu.dot_dimension_numbers<[1], [0], [0], [1], [0, 0, 1, 1], [], []>} : vector<16x128xf32>, vector<128x128xf32>, vector<16x128xf32> -> vector<16x128xf32>
    %105 = arith.addf %101, %104 : vector<16x128xf32>
    %c2_47 = arith.constant 2 : index
    %c0_48 = arith.constant 0 : index
    %106 = vector.load %arg15[%c2_47, %c0_48] : memref<18x128xf32, #tpu.memory_space<vmem>>, vector<16x128xf32>
    %c6_i32 = arith.constant 6 : i32
    %107 = vector.broadcast %c6_i32 : i32 to vector<16x128xi32>
    %108 = arith.cmpi sle, %94, %107 : vector<16x128xi32>
    %cst_49 = arith.constant 0.000000e+00 : f32
    %109 = vector.broadcast %cst_49 : f32 to vector<16x128xf32>
    %110 = arith.select %108, %106, %109 : vector<16x128xi1>, vector<16x128xf32>
    %c256 = arith.constant 256 : index
    %c0_50 = arith.constant 0 : index
    %111 = vector.load %arg4[%c256, %c0_50] : memref<384x128xf32, #tpu.memory_space<vmem>>, vector<128x128xf32>
    %cst_51 = arith.constant dense<0.000000e+00> : vector<16x128xf32>
    %112 = tpu.matmul %110, %111, %cst_51 {dimension_numbers = #tpu.dot_dimension_numbers<[1], [0], [0], [1], [0, 0, 1, 1], [], []>} : vector<16x128xf32>, vector<128x128xf32>, vector<16x128xf32> -> vector<16x128xf32>
    %113 = arith.addf %105, %112 : vector<16x128xf32>
    %cst_52 = arith.constant dense<0.000000e+00> : vector<128xf32>
    %114 = vector.multi_reduction <add>, %113, %cst_52 [0] : vector<16x128xf32> to vector<128xf32>
    %115 = vector.shape_cast %114 : vector<128xf32> to vector<1x128xf32>
    %116 = vector.extract_strided_slice %115 {offsets = [0, 16], sizes = [1, 112], strides = [1, 1]} : vector<1x128xf32> to vector<1x112xf32>
    %117 = vector.extract_strided_slice %115 {offsets = [0, 0], sizes = [1, 16], strides = [1, 1]} : vector<1x128xf32> to vector<1x16xf32>
    %118 = tpu.concatenate %116, %117 in 1 : vector<1x112xf32>, vector<1x16xf32> -> vector<1x128xf32>
    %119 = arith.addf %115, %118 : vector<1x128xf32>
    %120 = vector.extract_strided_slice %119 {offsets = [0, 32], sizes = [1, 96], strides = [1, 1]} : vector<1x128xf32> to vector<1x96xf32>
    %121 = vector.extract_strided_slice %119 {offsets = [0, 0], sizes = [1, 32], strides = [1, 1]} : vector<1x128xf32> to vector<1x32xf32>
    %122 = tpu.concatenate %120, %121 in 1 : vector<1x96xf32>, vector<1x32xf32> -> vector<1x128xf32>
    %123 = arith.addf %119, %122 : vector<1x128xf32>
    %124 = vector.extract_strided_slice %123 {offsets = [0, 64], sizes = [1, 64], strides = [1, 1]} : vector<1x128xf32> to vector<1x64xf32>
    %125 = vector.extract_strided_slice %123 {offsets = [0, 0], sizes = [1, 64], strides = [1, 1]} : vector<1x128xf32> to vector<1x64xf32>
    %126 = tpu.concatenate %124, %125 in 1 : vector<1x64xf32>, vector<1x64xf32> -> vector<1x128xf32>
    %127 = arith.addf %123, %126 : vector<1x128xf32>
    %128 = arith.mulf %113, %113 : vector<16x128xf32>
    %cst_53 = arith.constant dense<0.000000e+00> : vector<128xf32>
    %129 = vector.multi_reduction <add>, %128, %cst_53 [0] : vector<16x128xf32> to vector<128xf32>
    %130 = vector.shape_cast %129 : vector<128xf32> to vector<1x128xf32>
    %131 = vector.extract_strided_slice %130 {offsets = [0, 16], sizes = [1, 112], strides = [1, 1]} : vector<1x128xf32> to vector<1x112xf32>
    %132 = vector.extract_strided_slice %130 {offsets = [0, 0], sizes = [1, 16], strides = [1, 1]} : vector<1x128xf32> to vector<1x16xf32>
    %133 = tpu.concatenate %131, %132 in 1 : vector<1x112xf32>, vector<1x16xf32> -> vector<1x128xf32>
    %134 = arith.addf %130, %133 : vector<1x128xf32>
    %135 = vector.extract_strided_slice %134 {offsets = [0, 32], sizes = [1, 96], strides = [1, 1]} : vector<1x128xf32> to vector<1x96xf32>
    %136 = vector.extract_strided_slice %134 {offsets = [0, 0], sizes = [1, 32], strides = [1, 1]} : vector<1x128xf32> to vector<1x32xf32>
    %137 = tpu.concatenate %135, %136 in 1 : vector<1x96xf32>, vector<1x32xf32> -> vector<1x128xf32>
    %138 = arith.addf %134, %137 : vector<1x128xf32>
    %139 = vector.extract_strided_slice %138 {offsets = [0, 64], sizes = [1, 64], strides = [1, 1]} : vector<1x128xf32> to vector<1x64xf32>
    %140 = vector.extract_strided_slice %138 {offsets = [0, 0], sizes = [1, 64], strides = [1, 1]} : vector<1x128xf32> to vector<1x64xf32>
    %141 = tpu.concatenate %139, %140 in 1 : vector<1x64xf32>, vector<1x64xf32> -> vector<1x128xf32>
    %142 = arith.addf %138, %141 : vector<1x128xf32>
    %cst_54 = arith.constant 7.812500e-03 : f32
    %143 = vector.broadcast %cst_54 : f32 to vector<1x128xf32>
    %144 = arith.mulf %127, %143 : vector<1x128xf32>
    %cst_55 = arith.constant 7.812500e-03 : f32
    %145 = vector.broadcast %cst_55 : f32 to vector<1x128xf32>
    %146 = arith.mulf %142, %145 : vector<1x128xf32>
    %147 = arith.mulf %144, %144 : vector<1x128xf32>
    %148 = arith.subf %146, %147 : vector<1x128xf32>
    %cst_56 = arith.constant 0.000000e+00 : f32
    %149 = vector.broadcast %cst_56 : f32 to vector<1x128xf32>
    %150 = arith.maximumf %148, %149 : vector<1x128xf32>
    %151 = vector.broadcast %144 : vector<1x128xf32> to vector<16x128xf32>
    %152 = arith.subf %113, %151 : vector<16x128xf32>
    %c0_57 = arith.constant 0 : index
    %c0_58 = arith.constant 0 : index
    %153 = vector.load %arg5[%c0_57, %c0_58] : memref<2x128xf32, #tpu.memory_space<vmem>>, vector<1x128xf32>
    %cst_59 = arith.constant 9.99999974E-6 : f32
    %154 = vector.broadcast %cst_59 : f32 to vector<1x128xf32>
    %155 = arith.addf %150, %154 : vector<1x128xf32>
    %156 = math.rsqrt %155 : vector<1x128xf32>
    %157 = arith.mulf %153, %156 : vector<1x128xf32>
    %158 = vector.broadcast %157 : vector<1x128xf32> to vector<16x128xf32>
    %159 = arith.mulf %152, %158 : vector<16x128xf32>
    %c1_60 = arith.constant 1 : index
    %c0_61 = arith.constant 0 : index
    %160 = vector.load %arg5[%c1_60, %c0_61] : memref<2x128xf32, #tpu.memory_space<vmem>>, vector<1x128xf32>
    %161 = vector.broadcast %160 : vector<1x128xf32> to vector<16x128xf32>
    %162 = arith.addf %159, %161 : vector<16x128xf32>
    %cst_62 = arith.constant 0.000000e+00 : f32
    %163 = vector.broadcast %cst_62 : f32 to vector<16x128xf32>
    %164 = arith.maximumf %162, %163 : vector<16x128xf32>
    %c0_63 = arith.constant 0 : index
    %c0_64 = arith.constant 0 : index
    %165 = vector.load %arg16[%c0_63, %c0_64] : memref<16x128xf32, #tpu.memory_space<vmem>>, vector<16x128xf32>
    tpu.vector_store %arg16[%c0_63, %c0_64], %164 {strides = array<i32>} : memref<16x128xf32, #tpu.memory_space<vmem>>, vector<16x128xf32>,
    %c0_65 = arith.constant 0 : index
    %c0_66 = arith.constant 0 : index
    %166 = tpu.strided_load %arg16[%c0_65, %c0_66] {strides = array<i32: 2, 1>} : memref<16x128xf32, #tpu.memory_space<vmem>>, vector<8x128xf32>
    %c1_67 = arith.constant 1 : index
    %c0_68 = arith.constant 0 : index
    %167 = tpu.strided_load %arg16[%c1_67, %c0_68] {strides = array<i32: 2, 1>} : memref<16x128xf32, #tpu.memory_space<vmem>>, vector<8x128xf32>
    %168 = arith.maximumf %166, %167 : vector<8x128xf32>
    %169 = vector.extract_strided_slice %168 {offsets = [0, 16], sizes = [8, 112], strides = [1, 1]} : vector<8x128xf32> to vector<8x112xf32>
    %cst_69 = arith.constant 0.000000e+00 : f32
    %170 = vector.broadcast %cst_69 : f32 to vector<8x16xf32>
    %171 = tpu.concatenate %169, %170 in 1 : vector<8x112xf32>, vector<8x16xf32> -> vector<8x128xf32>
    %172 = arith.maximumf %168, %171 : vector<8x128xf32>
    %c1_70 = arith.constant 1 : index
    %c0_71 = arith.constant 0 : index
    %173 = vector.load %arg17[%c1_70, %c0_71] : memref<10x128xf32, #tpu.memory_space<vmem>>, vector<8x128xf32>
    tpu.vector_store %arg17[%c1_70, %c0_71], %172 {strides = array<i32>} : memref<10x128xf32, #tpu.memory_space<vmem>>, vector<8x128xf32>,
    %174 = tpu.iota {dimensions = array<i32: 0>} : vector<8x128xi32>
    %c3_i32 = arith.constant 3 : i32
    %175 = vector.broadcast %c3_i32 : i32 to vector<8x128xi32>
    %176 = arith.andi %174, %175 : vector<8x128xi32>
    %c0_72 = arith.constant 0 : index
    %c0_73 = arith.constant 0 : index
    %177 = vector.load %arg17[%c0_72, %c0_73] : memref<10x128xf32, #tpu.memory_space<vmem>>, vector<8x128xf32>
    %c1_i32_74 = arith.constant 1 : i32
    %178 = vector.broadcast %c1_i32_74 : i32 to vector<8x128xi32>
    %179 = arith.cmpi sge, %176, %178 : vector<8x128xi32>
    %cst_75 = arith.constant 0.000000e+00 : f32
    %180 = vector.broadcast %cst_75 : f32 to vector<8x128xf32>
    %181 = arith.select %179, %177, %180 : vector<8x128xi1>, vector<8x128xf32>
    %c0_76 = arith.constant 0 : index
    %c0_77 = arith.constant 0 : index
    %182 = vector.load %arg6[%c0_76, %c0_77] : memref<384x64xf32, #tpu.memory_space<vmem>>, vector<128x64xf32>
    %cst_78 = arith.constant dense<0.000000e+00> : vector<8x64xf32>
    %183 = tpu.matmul %181, %182, %cst_78 {dimension_numbers = #tpu.dot_dimension_numbers<[1], [0], [0], [1], [0, 0, 1, 1], [], []>} : vector<8x128xf32>, vector<128x64xf32>, vector<8x64xf32> -> vector<8x64xf32>
    %c1_79 = arith.constant 1 : index
    %c0_80 = arith.constant 0 : index
    %184 = vector.load %arg17[%c1_79, %c0_80] : memref<10x128xf32, #tpu.memory_space<vmem>>, vector<8x128xf32>
    %c128_81 = arith.constant 128 : index
    %c0_82 = arith.constant 0 : index
    %185 = vector.load %arg6[%c128_81, %c0_82] : memref<384x64xf32, #tpu.memory_space<vmem>>, vector<128x64xf32>
    %cst_83 = arith.constant dense<0.000000e+00> : vector<8x64xf32>
    %186 = tpu.matmul %184, %185, %cst_83 {dimension_numbers = #tpu.dot_dimension_numbers<[1], [0], [0], [1], [0, 0, 1, 1], [], []>} : vector<8x128xf32>, vector<128x64xf32>, vector<8x64xf32> -> vector<8x64xf32>
    %187 = arith.addf %183, %186 : vector<8x64xf32>
    %c2_84 = arith.constant 2 : index
    %c0_85 = arith.constant 0 : index
    %188 = vector.load %arg17[%c2_84, %c0_85] : memref<10x128xf32, #tpu.memory_space<vmem>>, vector<8x128xf32>
    %c2_i32 = arith.constant 2 : i32
    %189 = vector.broadcast %c2_i32 : i32 to vector<8x128xi32>
    %190 = arith.cmpi sle, %176, %189 : vector<8x128xi32>
    %cst_86 = arith.constant 0.000000e+00 : f32
    %191 = vector.broadcast %cst_86 : f32 to vector<8x128xf32>
    %192 = arith.select %190, %188, %191 : vector<8x128xi1>, vector<8x128xf32>
    %c256_87 = arith.constant 256 : index
    %c0_88 = arith.constant 0 : index
    %193 = vector.load %arg6[%c256_87, %c0_88] : memref<384x64xf32, #tpu.memory_space<vmem>>, vector<128x64xf32>
    %cst_89 = arith.constant dense<0.000000e+00> : vector<8x64xf32>
    %194 = tpu.matmul %192, %193, %cst_89 {dimension_numbers = #tpu.dot_dimension_numbers<[1], [0], [0], [1], [0, 0, 1, 1], [], []>} : vector<8x128xf32>, vector<128x64xf32>, vector<8x64xf32> -> vector<8x64xf32>
    %195 = arith.addf %187, %194 : vector<8x64xf32>
    %cst_90 = arith.constant dense<0.000000e+00> : vector<64xf32>
    %196 = vector.multi_reduction <add>, %195, %cst_90 [0] : vector<8x64xf32> to vector<64xf32>
    %197 = vector.shape_cast %196 : vector<64xf32> to vector<1x64xf32>
    %198 = vector.extract_strided_slice %197 {offsets = [0, 16], sizes = [1, 48], strides = [1, 1]} : vector<1x64xf32> to vector<1x48xf32>
    %199 = vector.extract_strided_slice %197 {offsets = [0, 0], sizes = [1, 16], strides = [1, 1]} : vector<1x64xf32> to vector<1x16xf32>
    %200 = tpu.concatenate %198, %199 in 1 : vector<1x48xf32>, vector<1x16xf32> -> vector<1x64xf32>
    %201 = arith.addf %197, %200 : vector<1x64xf32>
    %202 = vector.extract_strided_slice %201 {offsets = [0, 32], sizes = [1, 32], strides = [1, 1]} : vector<1x64xf32> to vector<1x32xf32>
    %203 = vector.extract_strided_slice %201 {offsets = [0, 0], sizes = [1, 32], strides = [1, 1]} : vector<1x64xf32> to vector<1x32xf32>
    %204 = tpu.concatenate %202, %203 in 1 : vector<1x32xf32>, vector<1x32xf32> -> vector<1x64xf32>
    %205 = arith.addf %201, %204 : vector<1x64xf32>
    %206 = arith.mulf %195, %195 : vector<8x64xf32>
    %cst_91 = arith.constant dense<0.000000e+00> : vector<64xf32>
    %207 = vector.multi_reduction <add>, %206, %cst_91 [0] : vector<8x64xf32> to vector<64xf32>
    %208 = vector.shape_cast %207 : vector<64xf32> to vector<1x64xf32>
    %209 = vector.extract_strided_slice %208 {offsets = [0, 16], sizes = [1, 48], strides = [1, 1]} : vector<1x64xf32> to vector<1x48xf32>
    %210 = vector.extract_strided_slice %208 {offsets = [0, 0], sizes = [1, 16], strides = [1, 1]} : vector<1x64xf32> to vector<1x16xf32>
    %211 = tpu.concatenate %209, %210 in 1 : vector<1x48xf32>, vector<1x16xf32> -> vector<1x64xf32>
    %212 = arith.addf %208, %211 : vector<1x64xf32>
    %213 = vector.extract_strided_slice %212 {offsets = [0, 32], sizes = [1, 32], strides = [1, 1]} : vector<1x64xf32> to vector<1x32xf32>
    %214 = vector.extract_strided_slice %212 {offsets = [0, 0], sizes = [1, 32], strides = [1, 1]} : vector<1x64xf32> to vector<1x32xf32>
    %215 = tpu.concatenate %213, %214 in 1 : vector<1x32xf32>, vector<1x32xf32> -> vector<1x64xf32>
    %216 = arith.addf %212, %215 : vector<1x64xf32>
    %cst_92 = arith.constant 3.125000e-02 : f32
    %217 = vector.broadcast %cst_92 : f32 to vector<1x64xf32>
    %218 = arith.mulf %205, %217 : vector<1x64xf32>
    %cst_93 = arith.constant 3.125000e-02 : f32
    %219 = vector.broadcast %cst_93 : f32 to vector<1x64xf32>
    %220 = arith.mulf %216, %219 : vector<1x64xf32>
    %221 = arith.mulf %218, %218 : vector<1x64xf32>
    %222 = arith.subf %220, %221 : vector<1x64xf32>
    %cst_94 = arith.constant 0.000000e+00 : f32
    %223 = vector.broadcast %cst_94 : f32 to vector<1x64xf32>
    %224 = arith.maximumf %222, %223 : vector<1x64xf32>
    %225 = vector.broadcast %218 : vector<1x64xf32> to vector<8x64xf32>
    %226 = arith.subf %195, %225 : vector<8x64xf32>
    %c0_95 = arith.constant 0 : index
    %c0_96 = arith.constant 0 : index
    %227 = vector.load %arg7[%c0_95, %c0_96] : memref<2x64xf32, #tpu.memory_space<vmem>>, vector<1x64xf32>
    %cst_97 = arith.constant 9.99999974E-6 : f32
    %228 = vector.broadcast %cst_97 : f32 to vector<1x64xf32>
    %229 = arith.addf %224, %228 : vector<1x64xf32>
    %230 = math.rsqrt %229 : vector<1x64xf32>
    %231 = arith.mulf %227, %230 : vector<1x64xf32>
    %232 = vector.broadcast %231 : vector<1x64xf32> to vector<8x64xf32>
    %233 = arith.mulf %226, %232 : vector<8x64xf32>
    %c1_98 = arith.constant 1 : index
    %c0_99 = arith.constant 0 : index
    %234 = vector.load %arg7[%c1_98, %c0_99] : memref<2x64xf32, #tpu.memory_space<vmem>>, vector<1x64xf32>
    %235 = vector.broadcast %234 : vector<1x64xf32> to vector<8x64xf32>
    %236 = arith.addf %233, %235 : vector<8x64xf32>
    %cst_100 = arith.constant 0.000000e+00 : f32
    %237 = vector.broadcast %cst_100 : f32 to vector<8x64xf32>
    %238 = arith.maximumf %236, %237 : vector<8x64xf32>
    %c1_101 = arith.constant 1 : index
    %c0_102 = arith.constant 0 : index
    %239 = vector.load %arg18[%c1_101, %c0_102] : memref<10x64xf32, #tpu.memory_space<vmem>>, vector<8x64xf32>
    tpu.vector_store %arg18[%c1_101, %c0_102], %238 {strides = array<i32>} : memref<10x64xf32, #tpu.memory_space<vmem>>, vector<8x64xf32>,
    %240 = tpu.iota {dimensions = array<i32: 0>} : vector<8x64xi32>
    %c3_i32_103 = arith.constant 3 : i32
    %241 = vector.broadcast %c3_i32_103 : i32 to vector<8x64xi32>
    %242 = arith.andi %240, %241 : vector<8x64xi32>
    %c0_104 = arith.constant 0 : index
    %c0_105 = arith.constant 0 : index
    %243 = vector.load %arg18[%c0_104, %c0_105] : memref<10x64xf32, #tpu.memory_space<vmem>>, vector<8x64xf32>
    %c1_i32_106 = arith.constant 1 : i32
    %244 = vector.broadcast %c1_i32_106 : i32 to vector<8x64xi32>
    %245 = arith.cmpi sge, %242, %244 : vector<8x64xi32>
    %cst_107 = arith.constant 0.000000e+00 : f32
    %246 = vector.broadcast %cst_107 : f32 to vector<8x64xf32>
    %247 = arith.select %245, %243, %246 : vector<8x64xi1>, vector<8x64xf32>
    %c0_108 = arith.constant 0 : index
    %c0_109 = arith.constant 0 : index
    %248 = vector.load %arg8[%c0_108, %c0_109] : memref<192x64xf32, #tpu.memory_space<vmem>>, vector<64x64xf32>
    %cst_110 = arith.constant dense<0.000000e+00> : vector<8x64xf32>
    %249 = tpu.matmul %247, %248, %cst_110 {dimension_numbers = #tpu.dot_dimension_numbers<[1], [0], [0], [1], [0, 0, 1, 1], [], []>} : vector<8x64xf32>, vector<64x64xf32>, vector<8x64xf32> -> vector<8x64xf32>
    %c1_111 = arith.constant 1 : index
    %c0_112 = arith.constant 0 : index
    %250 = vector.load %arg18[%c1_111, %c0_112] : memref<10x64xf32, #tpu.memory_space<vmem>>, vector<8x64xf32>
    %c64_113 = arith.constant 64 : index
    %c0_114 = arith.constant 0 : index
    %251 = vector.load %arg8[%c64_113, %c0_114] : memref<192x64xf32, #tpu.memory_space<vmem>>, vector<64x64xf32>
    %cst_115 = arith.constant dense<0.000000e+00> : vector<8x64xf32>
    %252 = tpu.matmul %250, %251, %cst_115 {dimension_numbers = #tpu.dot_dimension_numbers<[1], [0], [0], [1], [0, 0, 1, 1], [], []>} : vector<8x64xf32>, vector<64x64xf32>, vector<8x64xf32> -> vector<8x64xf32>
    %253 = arith.addf %249, %252 : vector<8x64xf32>
    %c2_116 = arith.constant 2 : index
    %c0_117 = arith.constant 0 : index
    %254 = vector.load %arg18[%c2_116, %c0_117] : memref<10x64xf32, #tpu.memory_space<vmem>>, vector<8x64xf32>
    %c2_i32_118 = arith.constant 2 : i32
    %255 = vector.broadcast %c2_i32_118 : i32 to vector<8x64xi32>
    %256 = arith.cmpi sle, %242, %255 : vector<8x64xi32>
    %cst_119 = arith.constant 0.000000e+00 : f32
    %257 = vector.broadcast %cst_119 : f32 to vector<8x64xf32>
    %258 = arith.select %256, %254, %257 : vector<8x64xi1>, vector<8x64xf32>
    %c128_120 = arith.constant 128 : index
    %c0_121 = arith.constant 0 : index
    %259 = vector.load %arg8[%c128_120, %c0_121] : memref<192x64xf32, #tpu.memory_space<vmem>>, vector<64x64xf32>
    %cst_122 = arith.constant dense<0.000000e+00> : vector<8x64xf32>
    %260 = tpu.matmul %258, %259, %cst_122 {dimension_numbers = #tpu.dot_dimension_numbers<[1], [0], [0], [1], [0, 0, 1, 1], [], []>} : vector<8x64xf32>, vector<64x64xf32>, vector<8x64xf32> -> vector<8x64xf32>
    %261 = arith.addf %253, %260 : vector<8x64xf32>
    %cst_123 = arith.constant dense<0.000000e+00> : vector<64xf32>
    %262 = vector.multi_reduction <add>, %261, %cst_123 [0] : vector<8x64xf32> to vector<64xf32>
    %263 = vector.shape_cast %262 : vector<64xf32> to vector<1x64xf32>
    %264 = vector.extract_strided_slice %263 {offsets = [0, 16], sizes = [1, 48], strides = [1, 1]} : vector<1x64xf32> to vector<1x48xf32>
    %265 = vector.extract_strided_slice %263 {offsets = [0, 0], sizes = [1, 16], strides = [1, 1]} : vector<1x64xf32> to vector<1x16xf32>
    %266 = tpu.concatenate %264, %265 in 1 : vector<1x48xf32>, vector<1x16xf32> -> vector<1x64xf32>
    %267 = arith.addf %263, %266 : vector<1x64xf32>
    %268 = vector.extract_strided_slice %267 {offsets = [0, 32], sizes = [1, 32], strides = [1, 1]} : vector<1x64xf32> to vector<1x32xf32>
    %269 = vector.extract_strided_slice %267 {offsets = [0, 0], sizes = [1, 32], strides = [1, 1]} : vector<1x64xf32> to vector<1x32xf32>
    %270 = tpu.concatenate %268, %269 in 1 : vector<1x32xf32>, vector<1x32xf32> -> vector<1x64xf32>
    %271 = arith.addf %267, %270 : vector<1x64xf32>
    %272 = arith.mulf %261, %261 : vector<8x64xf32>
    %cst_124 = arith.constant dense<0.000000e+00> : vector<64xf32>
    %273 = vector.multi_reduction <add>, %272, %cst_124 [0] : vector<8x64xf32> to vector<64xf32>
    %274 = vector.shape_cast %273 : vector<64xf32> to vector<1x64xf32>
    %275 = vector.extract_strided_slice %274 {offsets = [0, 16], sizes = [1, 48], strides = [1, 1]} : vector<1x64xf32> to vector<1x48xf32>
    %276 = vector.extract_strided_slice %274 {offsets = [0, 0], sizes = [1, 16], strides = [1, 1]} : vector<1x64xf32> to vector<1x16xf32>
    %277 = tpu.concatenate %275, %276 in 1 : vector<1x48xf32>, vector<1x16xf32> -> vector<1x64xf32>
    %278 = arith.addf %274, %277 : vector<1x64xf32>
    %279 = vector.extract_strided_slice %278 {offsets = [0, 32], sizes = [1, 32], strides = [1, 1]} : vector<1x64xf32> to vector<1x32xf32>
    %280 = vector.extract_strided_slice %278 {offsets = [0, 0], sizes = [1, 32], strides = [1, 1]} : vector<1x64xf32> to vector<1x32xf32>
    %281 = tpu.concatenate %279, %280 in 1 : vector<1x32xf32>, vector<1x32xf32> -> vector<1x64xf32>
    %282 = arith.addf %278, %281 : vector<1x64xf32>
    %cst_125 = arith.constant 3.125000e-02 : f32
    %283 = vector.broadcast %cst_125 : f32 to vector<1x64xf32>
    %284 = arith.mulf %271, %283 : vector<1x64xf32>
    %cst_126 = arith.constant 3.125000e-02 : f32
    %285 = vector.broadcast %cst_126 : f32 to vector<1x64xf32>
    %286 = arith.mulf %282, %285 : vector<1x64xf32>
    %287 = arith.mulf %284, %284 : vector<1x64xf32>
    %288 = arith.subf %286, %287 : vector<1x64xf32>
    %cst_127 = arith.constant 0.000000e+00 : f32
    %289 = vector.broadcast %cst_127 : f32 to vector<1x64xf32>
    %290 = arith.maximumf %288, %289 : vector<1x64xf32>
    %291 = vector.broadcast %284 : vector<1x64xf32> to vector<8x64xf32>
    %292 = arith.subf %261, %291 : vector<8x64xf32>
    %c0_128 = arith.constant 0 : index
    %c0_129 = arith.constant 0 : index
    %293 = vector.load %arg9[%c0_128, %c0_129] : memref<2x64xf32, #tpu.memory_space<vmem>>, vector<1x64xf32>
    %cst_130 = arith.constant 9.99999974E-6 : f32
    %294 = vector.broadcast %cst_130 : f32 to vector<1x64xf32>
    %295 = arith.addf %290, %294 : vector<1x64xf32>
    %296 = math.rsqrt %295 : vector<1x64xf32>
    %297 = arith.mulf %293, %296 : vector<1x64xf32>
    %298 = vector.broadcast %297 : vector<1x64xf32> to vector<8x64xf32>
    %299 = arith.mulf %292, %298 : vector<8x64xf32>
    %c1_131 = arith.constant 1 : index
    %c0_132 = arith.constant 0 : index
    %300 = vector.load %arg9[%c1_131, %c0_132] : memref<2x64xf32, #tpu.memory_space<vmem>>, vector<1x64xf32>
    %301 = vector.broadcast %300 : vector<1x64xf32> to vector<8x64xf32>
    %302 = arith.addf %299, %301 : vector<8x64xf32>
    %303 = math.tanh %302 : vector<8x64xf32>
    %c0_133 = arith.constant 0 : index
    %c0_134 = arith.constant 0 : index
    %304 = vector.load %arg19[%c0_133, %c0_134] : memref<8x64xf32, #tpu.memory_space<vmem>>, vector<8x64xf32>
    tpu.vector_store %arg19[%c0_133, %c0_134], %303 {strides = array<i32>} : memref<8x64xf32, #tpu.memory_space<vmem>>, vector<8x64xf32>,
    %cst_135 = arith.constant 0.000000e+00 : f32
    %305 = vector.broadcast %cst_135 : f32 to vector<2x64xf32>
    %c0_136 = arith.constant 0 : index
    %c0_137 = arith.constant 0 : index
    %306 = vector.load %arg11[%c0_136, %c0_137] : memref<1x64xf32, #tpu.memory_space<vmem>>, vector<1x64xf32>
    %307 = vector.broadcast %306 : vector<1x64xf32> to vector<2x64xf32>
    %308 = arith.addf %305, %307 : vector<2x64xf32>
    %c0_138 = arith.constant 0 : index
    %c0_139 = arith.constant 0 : index
    %309 = tpu.strided_load %arg19[%c0_138, %c0_139] {strides = array<i32: 4, 1>} : memref<8x64xf32, #tpu.memory_space<vmem>>, vector<2x64xf32>
    %c0_140 = arith.constant 0 : index
    %c0_141 = arith.constant 0 : index
    %310 = vector.load %arg10[%c0_140, %c0_141] : memref<256x64xf32, #tpu.memory_space<vmem>>, vector<64x64xf32>
    %cst_142 = arith.constant dense<0.000000e+00> : vector<2x64xf32>
    %311 = tpu.matmul %309, %310, %cst_142 {dimension_numbers = #tpu.dot_dimension_numbers<[1], [0], [0], [1], [0, 0, 1, 1], [], []>} : vector<2x64xf32>, vector<64x64xf32>, vector<2x64xf32> -> vector<2x64xf32>
    %312 = arith.addf %308, %311 : vector<2x64xf32>
    %c1_143 = arith.constant 1 : index
    %c0_144 = arith.constant 0 : index
    %313 = tpu.strided_load %arg19[%c1_143, %c0_144] {strides = array<i32: 4, 1>} : memref<8x64xf32, #tpu.memory_space<vmem>>, vector<2x64xf32>
    %c64_145 = arith.constant 64 : index
    %c0_146 = arith.constant 0 : index
    %314 = vector.load %arg10[%c64_145, %c0_146] : memref<256x64xf32, #tpu.memory_space<vmem>>, vector<64x64xf32>
    %cst_147 = arith.constant dense<0.000000e+00> : vector<2x64xf32>
    %315 = tpu.matmul %313, %314, %cst_147 {dimension_numbers = #tpu.dot_dimension_numbers<[1], [0], [0], [1], [0, 0, 1, 1], [], []>} : vector<2x64xf32>, vector<64x64xf32>, vector<2x64xf32> -> vector<2x64xf32>
    %316 = arith.addf %312, %315 : vector<2x64xf32>
    %c2_148 = arith.constant 2 : index
    %c0_149 = arith.constant 0 : index
    %317 = tpu.strided_load %arg19[%c2_148, %c0_149] {strides = array<i32: 4, 1>} : memref<8x64xf32, #tpu.memory_space<vmem>>, vector<2x64xf32>
    %c128_150 = arith.constant 128 : index
    %c0_151 = arith.constant 0 : index
    %318 = vector.load %arg10[%c128_150, %c0_151] : memref<256x64xf32, #tpu.memory_space<vmem>>, vector<64x64xf32>
    %cst_152 = arith.constant dense<0.000000e+00> : vector<2x64xf32>
    %319 = tpu.matmul %317, %318, %cst_152 {dimension_numbers = #tpu.dot_dimension_numbers<[1], [0], [0], [1], [0, 0, 1, 1], [], []>} : vector<2x64xf32>, vector<64x64xf32>, vector<2x64xf32> -> vector<2x64xf32>
    %320 = arith.addf %316, %319 : vector<2x64xf32>
    %c3 = arith.constant 3 : index
    %c0_153 = arith.constant 0 : index
    %321 = tpu.strided_load %arg19[%c3, %c0_153] {strides = array<i32: 4, 1>} : memref<8x64xf32, #tpu.memory_space<vmem>>, vector<2x64xf32>
    %c192 = arith.constant 192 : index
    %c0_154 = arith.constant 0 : index
    %322 = vector.load %arg10[%c192, %c0_154] : memref<256x64xf32, #tpu.memory_space<vmem>>, vector<64x64xf32>
    %cst_155 = arith.constant dense<0.000000e+00> : vector<2x64xf32>
    %323 = tpu.matmul %321, %322, %cst_155 {dimension_numbers = #tpu.dot_dimension_numbers<[1], [0], [0], [1], [0, 0, 1, 1], [], []>} : vector<2x64xf32>, vector<64x64xf32>, vector<2x64xf32> -> vector<2x64xf32>
    %324 = arith.addf %320, %323 : vector<2x64xf32>
    %c0_156 = arith.constant 0 : index
    %c0_157 = arith.constant 0 : index
    %325 = vector.load %arg12[%c0_156, %c0_157] : memref<2x64xf32, #tpu.memory_space<vmem>>, vector<2x64xf32>
    tpu.vector_store %arg12[%c0_156, %c0_157], %324 {strides = array<i32>} : memref<2x64xf32, #tpu.memory_space<vmem>>, vector<2x64xf32>,
    return
  }
  func.func @transform_0(%arg0: i32) -> (i32, i32) {
    %c0_i32 = arith.constant 0 : i32
    %c0_i32_0 = arith.constant 0 : i32
    %c0_i32_1 = arith.constant 0 : i32
    return %c0_i32, %c0_i32_0 : i32, i32
  }
  func.func @transform_1(%arg0: i32) -> (i32, i32) {
    %c0_i32 = arith.constant 0 : i32
    %c0_i32_0 = arith.constant 0 : i32
    %c0_i32_1 = arith.constant 0 : i32
    return %c0_i32, %c0_i32_0 : i32, i32
  }
  func.func @transform_2(%arg0: i32) -> (i32, i32) {
    %c0_i32 = arith.constant 0 : i32
    %c0_i32_0 = arith.constant 0 : i32
    %c0_i32_1 = arith.constant 0 : i32
    return %c0_i32, %c0_i32_0 : i32, i32
  }
  func.func @transform_3(%arg0: i32) -> (i32, i32) {
    %c0_i32 = arith.constant 0 : i32
    %c0_i32_0 = arith.constant 0 : i32
    %c0_i32_1 = arith.constant 0 : i32
    return %c0_i32, %c0_i32_0 : i32, i32
  }
  func.func @transform_4(%arg0: i32) -> (i32, i32) {
    %c0_i32 = arith.constant 0 : i32
    %c0_i32_0 = arith.constant 0 : i32
    %c0_i32_1 = arith.constant 0 : i32
    return %c0_i32, %c0_i32_0 : i32, i32
  }
  func.func @transform_5(%arg0: i32) -> (i32, i32) {
    %c0_i32 = arith.constant 0 : i32
    %c0_i32_0 = arith.constant 0 : i32
    %c0_i32_1 = arith.constant 0 : i32
    return %c0_i32, %c0_i32_0 : i32, i32
  }
  func.func @transform_6(%arg0: i32) -> (i32, i32) {
    %c0_i32 = arith.constant 0 : i32
    %c0_i32_0 = arith.constant 0 : i32
    %c0_i32_1 = arith.constant 0 : i32
    return %c0_i32, %c0_i32_0 : i32, i32
  }
  func.func @transform_7(%arg0: i32) -> (i32, i32) {
    %c0_i32 = arith.constant 0 : i32
    %c0_i32_0 = arith.constant 0 : i32
    %c0_i32_1 = arith.constant 0 : i32
    return %c0_i32, %c0_i32_0 : i32, i32
  }
  func.func @transform_8(%arg0: i32) -> (i32, i32) {
    %c0_i32 = arith.constant 0 : i32
    %c0_i32_0 = arith.constant 0 : i32
    %c0_i32_1 = arith.constant 0 : i32
    return %c0_i32, %c0_i32_0 : i32, i32
  }
  func.func @transform_9(%arg0: i32) -> (i32, i32) {
    %c0_i32 = arith.constant 0 : i32
    %c0_i32_0 = arith.constant 0 : i32
    %c0_i32_1 = arith.constant 0 : i32
    return %c0_i32, %c0_i32_0 : i32, i32
  }
  func.func @transform_10(%arg0: i32) -> (i32, i32) {
    %c0_i32 = arith.constant 0 : i32
    %c0_i32_0 = arith.constant 0 : i32
    %c0_i32_1 = arith.constant 0 : i32
    return %c0_i32, %c0_i32_0 : i32, i32
  }
  func.func @transform_11(%arg0: i32) -> (i32, i32) {
    %c0_i32 = arith.constant 0 : i32
    %c0_i32_0 = arith.constant 0 : i32
    %c0_i32_1 = arith.constant 0 : i32
    return %c0_i32, %c0_i32_0 : i32, i32
  }
}

</mosaic_0001>

<llo_original>
// kernel: crafter_encoder_forward.1
$region0: #{crafter_encoder_forward.1}
  #allocation0 [shape = 'u32[]', space=smem, size = 0x4, offset = 0x4, fixed_abs, tag = 'smem constant byte address 0x4 - core index']
  #allocation1 [shape = 'u32[72,128]{1,0:T(1,128)}', space=vmem, size = 0x9000, scoped, tag = 'internal scratch']
  #allocation2 [shape = 'f32[34,64]{1,0:T(8,128)}', space=vmem, size = 0x5000, scoped, tag = 'scratch operand']
  #allocation3 [shape = 'f32[32,128]{1,0:T(8,128)}', space=vmem, size = 0x4000, scoped, tag = 'scratch operand']
  #allocation4 [shape = 'f32[18,128]{1,0:T(8,128)}', space=vmem, size = 0x3000, scoped, tag = 'scratch operand']
  #allocation5 [shape = 'f32[16,128]{1,0:T(8,128)}', space=vmem, size = 0x2000, scoped, tag = 'scratch operand']
  #allocation6 [shape = 'f32[10,128]{1,0:T(8,128)}', space=vmem, size = 0x2000, scoped, tag = 'scratch operand']
  #allocation7 [shape = 'f32[10,64]{1,0:T(8,128)}', space=vmem, size = 0x2000, scoped, tag = 'scratch operand']
  #allocation8 [shape = 'f32[8,64]{1,0:T(8,128)}', space=vmem, size = 0x1000, scoped, tag = 'scratch operand']
  %s0 = inlined_call_operand.vmem [shape: f32[32,64], index: 0, kind: input, shape index: {}]
  %s1 = inlined_call_operand.vmem [shape: f32[192,128], index: 1, kind: input, shape index: {}]
  %s2 = inlined_call_operand.vmem [shape: f32[2,128], index: 2, kind: input, shape index: {}]
  %s3 = inlined_call_operand.vmem [shape: f32[384,128], index: 3, kind: input, shape index: {}]
  %s4 = inlined_call_operand.vmem [shape: f32[2,128], index: 4, kind: input, shape index: {}]
  %s5 = inlined_call_operand.vmem [shape: f32[384,64], index: 5, kind: input, shape index: {}]
  %s6 = inlined_call_operand.vmem [shape: f32[2,64], index: 6, kind: input, shape index: {}]
  %s7 = inlined_call_operand.vmem [shape: f32[192,64], index: 7, kind: input, shape index: {}]
  %s8 = inlined_call_operand.vmem [shape: f32[2,64], index: 8, kind: input, shape index: {}]
  %s9 = inlined_call_operand.vmem [shape: f32[256,64], index: 9, kind: input, shape index: {}]
  %s10 = inlined_call_operand.vmem [shape: f32[1,64], index: 10, kind: input, shape index: {}]
  %s11 = inlined_call_operand.vmem [shape: f32[2,64], index: 11, kind: output, shape index: {}]
  %s12 = sld [smem:[#allocation0]]
  $region54: #{crafter_encoder_forward.1} parent=0
    _
  %s14 = ssub.s32 1, %s12
  %s15 = scalar_select 0, %s14, %s12
  // Predicated region
  $region2: #{crafter_encoder_forward.1} parent=0 // pred_check
    _
  $region3: #{crafter_encoder_forward.1} parent=0 // pred_check_branch
    %17 = sbr.rel (0) target = $region5
  $region4: #{crafter_encoder_forward.1} parent=0 // pred_region
    _
  $region5: #{crafter_encoder_forward.1} parent=0 // pred_fallthru
    _
  // Predicated region
  $region6: #{crafter_encoder_forward.1} parent=0 // pred_check
    _
  $region7: #{crafter_encoder_forward.1} parent=0 // pred_check_branch
    %19 = sbr.rel (0) target = $region9
  $region8: #{crafter_encoder_forward.1} parent=0 // pred_region
    _
  $region9: #{crafter_encoder_forward.1} parent=0 // pred_fallthru
    _
  // Predicated region
  $region10: #{crafter_encoder_forward.1} parent=0 // pred_check
    _
  $region11: #{crafter_encoder_forward.1} parent=0 // pred_check_branch
    %21 = sbr.rel (0) target = $region13
  $region12: #{crafter_encoder_forward.1} parent=0 // pred_region
    _
  $region13: #{crafter_encoder_forward.1} parent=0 // pred_fallthru
    _
  // Predicated region
  $region14: #{crafter_encoder_forward.1} parent=0 // pred_check
    _
  $region15: #{crafter_encoder_forward.1} parent=0 // pred_check_branch
    %23 = sbr.rel (0) target = $region17
  $region16: #{crafter_encoder_forward.1} parent=0 // pred_region
    _
  $region17: #{crafter_encoder_forward.1} parent=0 // pred_fallthru
    _
  // Predicated region
  $region18: #{crafter_encoder_forward.1} parent=0 // pred_check
    _
  $region19: #{crafter_encoder_forward.1} parent=0 // pred_check_branch
    %25 = sbr.rel (0) target = $region21
  $region20: #{crafter_encoder_forward.1} parent=0 // pred_region
    _
  $region21: #{crafter_encoder_forward.1} parent=0 // pred_fallthru
    _
  // Predicated region
  $region22: #{crafter_encoder_forward.1} parent=0 // pred_check
    _
  $region23: #{crafter_encoder_forward.1} parent=0 // pred_check_branch
    %27 = sbr.rel (0) target = $region25
  $region24: #{crafter_encoder_forward.1} parent=0 // pred_region
    _
  $region25: #{crafter_encoder_forward.1} parent=0 // pred_fallthru
    _
  // Predicated region
  $region26: #{crafter_encoder_forward.1} parent=0 // pred_check
    _
  $region27: #{crafter_encoder_forward.1} parent=0 // pred_check_branch
    %29 = sbr.rel (0) target = $region29
  $region28: #{crafter_encoder_forward.1} parent=0 // pred_region
    _
  $region29: #{crafter_encoder_forward.1} parent=0 // pred_fallthru
    _
  // Predicated region
  $region30: #{crafter_encoder_forward.1} parent=0 // pred_check
    _
  $region31: #{crafter_encoder_forward.1} parent=0 // pred_check_branch
    %31 = sbr.rel (0) target = $region33
  $region32: #{crafter_encoder_forward.1} parent=0 // pred_region
    _
  $region33: #{crafter_encoder_forward.1} parent=0 // pred_fallthru
    _
  // Predicated region
  $region34: #{crafter_encoder_forward.1} parent=0 // pred_check
    _
  $region35: #{crafter_encoder_forward.1} parent=0 // pred_check_branch
    %33 = sbr.rel (0) target = $region37
  $region36: #{crafter_encoder_forward.1} parent=0 // pred_region
    _
  $region37: #{crafter_encoder_forward.1} parent=0 // pred_fallthru
    _
  // Predicated region
  $region38: #{crafter_encoder_forward.1} parent=0 // pred_check
    _
  $region39: #{crafter_encoder_forward.1} parent=0 // pred_check_branch
    %35 = sbr.rel (0) target = $region41
  $region40: #{crafter_encoder_forward.1} parent=0 // pred_region
    _
  $region41: #{crafter_encoder_forward.1} parent=0 // pred_fallthru
    _
  // Predicated region
  $region42: #{crafter_encoder_forward.1} parent=0 // pred_check
    _
  $region43: #{crafter_encoder_forward.1} parent=0 // pred_check_branch
    %37 = sbr.rel (0) target = $region45
  $region44: #{crafter_encoder_forward.1} parent=0 // pred_region
    _
  $region45: #{crafter_encoder_forward.1} parent=0 // pred_fallthru
    _
  %v38 = vld [vmem:[%s0] sm:$0xff]
  %v39 = vld [vmem:[%s0 + $0x8] sm:$0xff]
  %v40 = vld [vmem:[%s0 + $0x10] sm:$0xff]
  %v41 = vld [vmem:[%s0 + $0x18] sm:$0xff]
  %vm42 = vcmask 523264
  %43 = vst.msk [vmem:[#allocation2 + $0x1] sm:$0xff] %vm42, %v38
  %44 = vst.msk [vmem:[#allocation2 + $0x9] sm:$0xff] %vm42, %v39
  %45 = vst.msk [vmem:[#allocation2 + $0x11] sm:$0xff] %vm42, %v40
  %46 = vst.msk [vmem:[#allocation2 + $0x19] sm:$0xff] %vm42, %v41
  %v47 = vlaneseq
  %v48 = vshrl.u32 %v47, 7
  %v49 = vadd.s32 %v48, 8
  %v50 = vadd.s32 %v48, 16
  %v51 = vadd.s32 %v48, 24
  %v52 = vand.u32 %v48, 15
  %v53 = vand.u32 %v49, 15
  %v54 = vand.u32 %v50, 15
  %v55 = vand.u32 %v51, 15
  %v56 = vld [vmem:[#allocation2] sm:$0xff]
  %v57 = vld [vmem:[#allocation2 + $0x8] sm:$0xff]
  %v58 = vld [vmem:[#allocation2 + $0x10] sm:$0xff]
  %v59 = vld [vmem:[#allocation2 + $0x18] sm:$0xff]
  %vm60 = vcmp.ge.s32.totalorder %v52, 1
  %vm61 = vcmp.ge.s32.totalorder %v53, 1
  %vm62 = vcmp.ge.s32.totalorder %v54, 1
  %vm63 = vcmp.ge.s32.totalorder %v55, 1
  %v64 = vsel %vm60, %v56, 0.0
  %v65 = vsel %vm61, %v57, 0.0
  %v66 = vsel %vm62, %v58, 0.0
  %v67 = vsel %vm63, %v59, 0.0
  %v68 = vld [vmem:[%s1] sm:$0xff]
  %v69 = vld [vmem:[%s1 + $0x8] sm:$0xff]
  %v70 = vld [vmem:[%s1 + $0x10] sm:$0xff]
  %v71 = vld [vmem:[%s1 + $0x18] sm:$0xff]
  %v72 = vld [vmem:[%s1 + $0x20] sm:$0xff]
  %v73 = vld [vmem:[%s1 + $0x28] sm:$0xff]
  %v74 = vld [vmem:[%s1 + $0x30] sm:$0xff]
  %v75 = vld [vmem:[%s1 + $0x38] sm:$0xff]
  %v76 = vld [vmem:[#allocation2 + $0x1] sm:$0xff]
  %v77 = vld [vmem:[#allocation2 + $0x9] sm:$0xff]
  %v78 = vld [vmem:[#allocation2 + $0x11] sm:$0xff]
  %v79 = vld [vmem:[#allocation2 + $0x19] sm:$0xff]
  %v80 = vld [vmem:[%s1 + $0x40] sm:$0xff]
  %v81 = vld [vmem:[%s1 + $0x48] sm:$0xff]
  %v82 = vld [vmem:[%s1 + $0x50] sm:$0xff]
  %v83 = vld [vmem:[%s1 + $0x58] sm:$0xff]
  %v84 = vld [vmem:[%s1 + $0x60] sm:$0xff]
  %v85 = vld [vmem:[%s1 + $0x68] sm:$0xff]
  %v86 = vld [vmem:[%s1 + $0x70] sm:$0xff]
  %v87 = vld [vmem:[%s1 + $0x78] sm:$0xff]
  %v89 = vsel %vm42, %v76, 0
  %v92 = vsel %vm42, %v77, 0
  %v95 = vsel %vm42, %v78, 0
  %v98 = vsel %vm42, %v79, 0
  %100 = vmatpush.msra.mxu0 0.0
  %101 = vmatpush.msra.mxu0 0.0
  %102 = vmatpush.msra.mxu0 0.0
  %103 = vmatpush.msra.mxu0 0.0
  %104 = vmatpush.msra.mxu0 0.0
  %105 = vmatpush.msra.mxu0 0.0
  %106 = vmatpush.msra.mxu0 0.0
  %107 = vmatpush.msra.mxu0 0.0
  %108 = vmatpush.msra.mxu0 %v87
  %109 = vmatpush.msra.mxu0 %v86
  %110 = vmatpush.msra.mxu0 %v85
  %111 = vmatpush.msra.mxu0 %v84
  %112 = vmatpush.msra.mxu0 %v83
  %113 = vmatpush.msra.mxu0 %v82
  %114 = vmatpush.msra.mxu0 %v81
  %115 = vmatpush.msra.mxu0 %v80
  %116 = vmatmul.f32.gmra.mxu0 %v89
  %v117 = vpop.f32.mrf.mxu0
  %v118 = vadd.f32 0.0, %v117
  %119 = vmatmul.f32.gmra.mxu0 %v92
  %v120 = vpop.f32.mrf.mxu0
  %v121 = vadd.f32 0.0, %v120
  %122 = vmatmul.f32.gmra.mxu0 %v95
  %v123 = vpop.f32.mrf.mxu0
  %v124 = vadd.f32 0.0, %v123
  %125 = vmatmul.f32.gmra.mxu0 %v98
  %v126 = vpop.f32.mrf.mxu0
  %v127 = vadd.f32 0.0, %v126
  %128 = vdwg.mxu0
  %v130 = vsel %vm42, %v64, 0
  %v133 = vsel %vm42, %v65, 0
  %v136 = vsel %vm42, %v66, 0
  %v139 = vsel %vm42, %v67, 0
  %141 = vmatpush.msra.mxu0 0.0
  %142 = vmatpush.msra.mxu0 0.0
  %143 = vmatpush.msra.mxu0 0.0
  %144 = vmatpush.msra.mxu0 0.0
  %145 = vmatpush.msra.mxu0 0.0
  %146 = vmatpush.msra.mxu0 0.0
  %147 = vmatpush.msra.mxu0 0.0
  %148 = vmatpush.msra.mxu0 0.0
  %149 = vmatpush.msra.mxu0 %v75
  %150 = vmatpush.msra.mxu0 %v74
  %151 = vmatpush.msra.mxu0 %v73
  %152 = vmatpush.msra.mxu0 %v72
  %153 = vmatpush.msra.mxu0 %v71
  %154 = vmatpush.msra.mxu0 %v70
  %155 = vmatpush.msra.mxu0 %v69
  %156 = vmatpush.msra.mxu0 %v68
  %157 = vmatmul.f32.gmra.mxu0 %v130
  %v158 = vpop.f32.mrf.mxu0
  %v159 = vadd.f32 %v118, %v158
  %160 = vmatmul.f32.gmra.mxu0 %v133
  %v161 = vpop.f32.mrf.mxu0
  %v162 = vadd.f32 %v121, %v161
  %163 = vmatmul.f32.gmra.mxu0 %v136
  %v164 = vpop.f32.mrf.mxu0
  %v165 = vadd.f32 %v124, %v164
  %166 = vmatmul.f32.gmra.mxu0 %v139
  %v167 = vpop.f32.mrf.mxu0
  %v168 = vadd.f32 %v127, %v167
  %169 = vdwg.mxu0
  %v170 = vld [vmem:[#allocation2 + $0x2] sm:$0xff]
  %v171 = vld [vmem:[#allocation2 + $0xa] sm:$0xff]
  %v172 = vld [vmem:[#allocation2 + $0x12] sm:$0xff]
  %v173 = vld [vmem:[#allocation2 + $0x1a] sm:$0xff]
  %vm174 = vcmp.le.s32.totalorder %v52, 14
  %vm175 = vcmp.le.s32.totalorder %v53, 14
  %vm176 = vcmp.le.s32.totalorder %v54, 14
  %vm177 = vcmp.le.s32.totalorder %v55, 14
  %v178 = vsel %vm174, %v170, 0.0
  %v179 = vsel %vm175, %v171, 0.0
  %v180 = vsel %vm176, %v172, 0.0
  %v181 = vsel %vm177, %v173, 0.0
  %v182 = vld [vmem:[%s1 + $0x80] sm:$0xff]
  %v183 = vld [vmem:[%s1 + $0x88] sm:$0xff]
  %v184 = vld [vmem:[%s1 + $0x90] sm:$0xff]
  %v185 = vld [vmem:[%s1 + $0x98] sm:$0xff]
  %v186 = vld [vmem:[%s1 + $0xa0] sm:$0xff]
  %v187 = vld [vmem:[%s1 + $0xa8] sm:$0xff]
  %v188 = vld [vmem:[%s1 + $0xb0] sm:$0xff]
  %v189 = vld [vmem:[%s1 + $0xb8] sm:$0xff]
  %v191 = vsel %vm42, %v178, 0
  %v194 = vsel %vm42, %v179, 0
  %v197 = vsel %vm42, %v180, 0
  %v200 = vsel %vm42, %v181, 0
  %202 = vmatpush.msra.mxu0 0.0
  %203 = vmatpush.msra.mxu0 0.0
  %204 = vmatpush.msra.mxu0 0.0
  %205 = vmatpush.msra.mxu0 0.0
  %206 = vmatpush.msra.mxu0 0.0
  %207 = vmatpush.msra.mxu0 0.0
  %208 = vmatpush.msra.mxu0 0.0
  %209 = vmatpush.msra.mxu0 0.0
  %210 = vmatpush.msra.mxu0 %v189
  %211 = vmatpush.msra.mxu0 %v188
  %212 = vmatpush.msra.mxu0 %v187
  %213 = vmatpush.msra.mxu0 %v186
  %214 = vmatpush.msra.mxu0 %v185
  %215 = vmatpush.msra.mxu0 %v184
  %216 = vmatpush.msra.mxu0 %v183
  %217 = vmatpush.msra.mxu0 %v182
  %218 = vmatmul.f32.gmra.mxu0 %v191
  %v219 = vpop.f32.mrf.mxu0
  %v220 = vadd.f32 0.0, %v219
  %221 = vmatmul.f32.gmra.mxu0 %v194
  %v222 = vpop.f32.mrf.mxu0
  %v223 = vadd.f32 0.0, %v222
  %224 = vmatmul.f32.gmra.mxu0 %v197
  %v225 = vpop.f32.mrf.mxu0
  %v226 = vadd.f32 0.0, %v225
  %227 = vmatmul.f32.gmra.mxu0 %v200
  %v228 = vpop.f32.mrf.mxu0
  %v229 = vadd.f32 0.0, %v228
  %230 = vdwg.mxu0
  %v231 = vadd.f32 %v159, %v220
  %v232 = vadd.f32 %v162, %v223
  %v233 = vadd.f32 %v165, %v226
  %v234 = vadd.f32 %v168, %v229
  %v235 = vadd.f32 %v231, %v232
  %v236 = vadd.f32 %v235, %v233
  %v237 = vadd.f32 %v236, %v234
  %v238 = vrot.slane %v237, 4
  %v239 = vadd.f32 %v237, %v238
  %v240 = vrot.slane %v239, 2
  %v241 = vadd.f32 %v239, %v240
  %v242 = vrot.slane %v241, 1
  %v243 = vadd.f32 %v241, %v242
  %245 = vrot.lane.b32.xlu0 %v243, 120
  %v246 = vpop.permute.xlu0 %245
  %vm248 = vcmask 982016
  %v249 = vadd.f32 %v243, %v246
  %251 = vrot.lane.b32.xlu0 %v249, 112
  %v252 = vpop.permute.xlu0 %251
  %vm254 = vcmask 916480
  %v255 = vadd.f32 %v249, %v252
  %257 = vrot.lane.b32.xlu0 %v255, 96
  %v258 = vpop.permute.xlu0 %257
  %v260 = vadd.f32 %v255, %v258
  %262 = vrot.lane.b32.xlu0 %v260, 64
  %v263 = vpop.permute.xlu0 %262
  %v265 = vadd.f32 %v260, %v263
  %v266 = vmul.f32 %v231, %v231
  %v267 = vmul.f32 %v232, %v232
  %v268 = vmul.f32 %v233, %v233
  %v269 = vmul.f32 %v234, %v234
  %v270 = vadd.f32 %v266, %v267
  %v271 = vadd.f32 %v270, %v268
  %v272 = vadd.f32 %v271, %v269
  %v273 = vrot.slane %v272, 4
  %v274 = vadd.f32 %v272, %v273
  %v275 = vrot.slane %v274, 2
  %v276 = vadd.f32 %v274, %v275
  %v277 = vrot.slane %v276, 1
  %v278 = vadd.f32 %v276, %v277
  %280 = vrot.lane.b32.xlu0 %v278, 120
  %v281 = vpop.permute.xlu0 %280
  %v283 = vadd.f32 %v278, %v281
  %285 = vrot.lane.b32.xlu0 %v283, 112
  %v286 = vpop.permute.xlu0 %285
  %v288 = vadd.f32 %v283, %v286
  %290 = vrot.lane.b32.xlu0 %v288, 96
  %v291 = vpop.permute.xlu0 %290
  %v293 = vadd.f32 %v288, %v291
  %295 = vrot.lane.b32.xlu0 %v293, 64
  %v296 = vpop.permute.xlu0 %295
  %v298 = vadd.f32 %v293, %v296
  %v299 = vmul.f32 %v265, 0.001953125
  %v300 = vmul.f32 %v298, 0.001953125
  %v301 = vmul.f32 %v299, %v299
  %v302 = vsub.f32 %v300, %v301
  %v303 = vmax.f32 %v302, 0.0
  %v304 = vperm.slane %v299, 0
  %v305 = vsub.f32 %v231, %v304
  %v306 = vsub.f32 %v232, %v304
  %v307 = vsub.f32 %v233, %v304
  %v308 = vsub.f32 %v234, %v304
  %v309 = vld [vmem:[%s2] sm:$0x1]
  %v310 = vadd.f32 %v303, 1e-05
  %v311 = vrsqrt.pop %v310
  %v312 = vmul.f32 %v311, %v310
  %v313 = vmul.f32 %v312, %v311
  %v314 = vmul.f32 0.5, %v313
  %v315 = vsub.f32 1.5, %v314
  %v316 = vmul.f32 %v311, %v315
  %vm317 = vweird.f32 %v310
  %vm318 = vweird.f32 %v311
  %vm319 = vmor %vm317, %vm318
  %v320 = vsel %vm319, %v311, %v316
  %v321 = vmul.f32 %v309, %v320
  %v322 = vperm.slane %v321, 0
  %v323 = vmul.f32 %v305, %v322
  %v324 = vmul.f32 %v306, %v322
  %v325 = vmul.f32 %v307, %v322
  %v326 = vmul.f32 %v308, %v322
  %v327 = vld [vmem:[%s2 + $0x1] sm:$0x1]
  %v328 = vperm.slane %v327, 0
  %v329 = vadd.f32 %v323, %v328
  %v330 = vadd.f32 %v324, %v328
  %v331 = vadd.f32 %v325, %v328
  %v332 = vadd.f32 %v326, %v328
  %v333 = vmax.f32 %v329, 0.0
  %v334 = vmax.f32 %v330, 0.0
  %v335 = vmax.f32 %v331, 0.0
  %v336 = vmax.f32 %v332, 0.0
  %337 = vst [vmem:[#allocation3] sm:$0xff] %v333
  %338 = vst [vmem:[#allocation3 + $0x8] sm:$0xff] %v334
  %339 = vst [vmem:[#allocation3 + $0x10] sm:$0xff] %v335
  %340 = vst [vmem:[#allocation3 + $0x18] sm:$0xff] %v336
  %v341 = vld [vmem:[#allocation3] ss:$2 sm:$0xff]
  %s342 = scalar_lea.vmem [#allocation3], 16
  %v343 = vld [vmem:[%s342] ss:$2 sm:$0xff]
  %s344 = scalar_lea.vmem [#allocation3], 1
  %v345 = vld [vmem:[%s344] ss:$2 sm:$0xff]
  %s346 = scalar_lea.vmem [#allocation3], 17
  %v347 = vld [vmem:[%s346] ss:$2 sm:$0xff]
  %v348 = vmax.f32 %v341, %v345
  %v349 = vmax.f32 %v343, %v347
  %352 = vrot.lane.b32.xlu0 %v348, 120
  %v353 = vpop.permute.xlu0 %352
  %354 = vrot.lane.b32.xlu0 %v349, 120
  %v355 = vpop.permute.xlu0 %354
  %v358 = vsel %vm248, %v353, 0.0
  %v359 = vsel %vm248, %v355, 0.0
  %v360 = vmax.f32 %v348, %v358
  %v361 = vmax.f32 %v349, %v359
  %362 = vst [vmem:[#allocation4 + $0x1] sm:$0xff] %v360
  %363 = vst [vmem:[#allocation4 + $0x9] sm:$0xff] %v361
  %v364 = vand.u32 %v48, 7
  %v365 = vand.u32 %v49, 7
  %v366 = vld [vmem:[#allocation4] sm:$0xff]
  %v367 = vld [vmem:[#allocation4 + $0x8] sm:$0xff]
  %vm368 = vcmp.ge.s32.totalorder %v364, 1
  %vm369 = vcmp.ge.s32.totalorder %v365, 1
  %v370 = vsel %vm368, %v366, 0.0
  %v371 = vsel %vm369, %v367, 0.0
  %v372 = vld [vmem:[%s3] sm:$0xff]
  %v373 = vld [vmem:[%s3 + $0x8] sm:$0xff]
  %v374 = vld [vmem:[%s3 + $0x10] sm:$0xff]
  %v375 = vld [vmem:[%s3 + $0x18] sm:$0xff]
  %v376 = vld [vmem:[%s3 + $0x20] sm:$0xff]
  %v377 = vld [vmem:[%s3 + $0x28] sm:$0xff]
  %v378 = vld [vmem:[%s3 + $0x30] sm:$0xff]
  %v379 = vld [vmem:[%s3 + $0x38] sm:$0xff]
  %v380 = vld [vmem:[%s3 + $0x40] sm:$0xff]
  %v381 = vld [vmem:[%s3 + $0x48] sm:$0xff]
  %v382 = vld [vmem:[%s3 + $0x50] sm:$0xff]
  %v383 = vld [vmem:[%s3 + $0x58] sm:$0xff]
  %v384 = vld [vmem:[%s3 + $0x60] sm:$0xff]
  %v385 = vld [vmem:[%s3 + $0x68] sm:$0xff]
  %v386 = vld [vmem:[%s3 + $0x70] sm:$0xff]
  %v387 = vld [vmem:[%s3 + $0x78] sm:$0xff]
  %v388 = vld [vmem:[#allocation4 + $0x1] sm:$0xff]
  %v389 = vld [vmem:[#allocation4 + $0x9] sm:$0xff]
  %v390 = vld [vmem:[%s3 + $0x80] sm:$0xff]
  %v391 = vld [vmem:[%s3 + $0x88] sm:$0xff]
  %v392 = vld [vmem:[%s3 + $0x90] sm:$0xff]
  %v393 = vld [vmem:[%s3 + $0x98] sm:$0xff]
  %v394 = vld [vmem:[%s3 + $0xa0] sm:$0xff]
  %v395 = vld [vmem:[%s3 + $0xa8] sm:$0xff]
  %v396 = vld [vmem:[%s3 + $0xb0] sm:$0xff]
  %v397 = vld [vmem:[%s3 + $0xb8] sm:$0xff]
  %v398 = vld [vmem:[%s3 + $0xc0] sm:$0xff]
  %v399 = vld [vmem:[%s3 + $0xc8] sm:$0xff]
  %v400 = vld [vmem:[%s3 + $0xd0] sm:$0xff]
  %v401 = vld [vmem:[%s3 + $0xd8] sm:$0xff]
  %v402 = vld [vmem:[%s3 + $0xe0] sm:$0xff]
  %v403 = vld [vmem:[%s3 + $0xe8] sm:$0xff]
  %v404 = vld [vmem:[%s3 + $0xf0] sm:$0xff]
  %v405 = vld [vmem:[%s3 + $0xf8] sm:$0xff]
  %406 = vmatpush.msra.mxu0 %v405
  %407 = vmatpush.msra.mxu0 %v404
  %408 = vmatpush.msra.mxu0 %v403
  %409 = vmatpush.msra.mxu0 %v402
  %410 = vmatpush.msra.mxu0 %v401
  %411 = vmatpush.msra.mxu0 %v400
  %412 = vmatpush.msra.mxu0 %v399
  %413 = vmatpush.msra.mxu0 %v398
  %414 = vmatpush.msra.mxu0 %v397
  %415 = vmatpush.msra.mxu0 %v396
  %416 = vmatpush.msra.mxu0 %v395
  %417 = vmatpush.msra.mxu0 %v394
  %418 = vmatpush.msra.mxu0 %v393
  %419 = vmatpush.msra.mxu0 %v392
  %420 = vmatpush.msra.mxu0 %v391
  %421 = vmatpush.msra.mxu0 %v390
  %422 = vmatmul.f32.gmra.mxu0 %v388
  %v423 = vpop.f32.mrf.mxu0
  %v424 = vadd.f32 0.0, %v423
  %425 = vmatmul.f32.gmra.mxu0 %v389
  %v426 = vpop.f32.mrf.mxu0
  %v427 = vadd.f32 0.0, %v426
  %428 = vdwg.mxu0
  %429 = vmatpush.msra.mxu0 %v387
  %430 = vmatpush.msra.mxu0 %v386
  %431 = vmatpush.msra.mxu0 %v385
  %432 = vmatpush.msra.mxu0 %v384
  %433 = vmatpush.msra.mxu0 %v383
  %434 = vmatpush.msra.mxu0 %v382
  %435 = vmatpush.msra.mxu0 %v381
  %436 = vmatpush.msra.mxu0 %v380
  %437 = vmatpush.msra.mxu0 %v379
  %438 = vmatpush.msra.mxu0 %v378
  %439 = vmatpush.msra.mxu0 %v377
  %440 = vmatpush.msra.mxu0 %v376
  %441 = vmatpush.msra.mxu0 %v375
  %442 = vmatpush.msra.mxu0 %v374
  %443 = vmatpush.msra.mxu0 %v373
  %444 = vmatpush.msra.mxu0 %v372
  %445 = vmatmul.f32.gmra.mxu0 %v370
  %v446 = vpop.f32.mrf.mxu0
  %v447 = vadd.f32 %v424, %v446
  %448 = vmatmul.f32.gmra.mxu0 %v371
  %v449 = vpop.f32.mrf.mxu0
  %v450 = vadd.f32 %v427, %v449
  %451 = vdwg.mxu0
  %v452 = vld [vmem:[#allocation4 + $0x2] sm:$0xff]
  %v453 = vld [vmem:[#allocation4 + $0xa] sm:$0xff]
  %vm454 = vcmp.le.s32.totalorder %v364, 6
  %vm455 = vcmp.le.s32.totalorder %v365, 6
  %v456 = vsel %vm454, %v452, 0.0
  %v457 = vsel %vm455, %v453, 0.0
  %v458 = vld [vmem:[%s3 + $0x100] sm:$0xff]
  %v459 = vld [vmem:[%s3 + $0x108] sm:$0xff]
  %v460 = vld [vmem:[%s3 + $0x110] sm:$0xff]
  %v461 = vld [vmem:[%s3 + $0x118] sm:$0xff]
  %v462 = vld [vmem:[%s3 + $0x120] sm:$0xff]
  %v463 = vld [vmem:[%s3 + $0x128] sm:$0xff]
  %v464 = vld [vmem:[%s3 + $0x130] sm:$0xff]
  %v465 = vld [vmem:[%s3 + $0x138] sm:$0xff]
  %v466 = vld [vmem:[%s3 + $0x140] sm:$0xff]
  %v467 = vld [vmem:[%s3 + $0x148] sm:$0xff]
  %v468 = vld [vmem:[%s3 + $0x150] sm:$0xff]
  %v469 = vld [vmem:[%s3 + $0x158] sm:$0xff]
  %v470 = vld [vmem:[%s3 + $0x160] sm:$0xff]
  %v471 = vld [vmem:[%s3 + $0x168] sm:$0xff]
  %v472 = vld [vmem:[%s3 + $0x170] sm:$0xff]
  %v473 = vld [vmem:[%s3 + $0x178] sm:$0xff]
  %474 = vmatpush.msra.mxu0 %v473
  %475 = vmatpush.msra.mxu0 %v472
  %476 = vmatpush.msra.mxu0 %v471
  %477 = vmatpush.msra.mxu0 %v470
  %478 = vmatpush.msra.mxu0 %v469
  %479 = vmatpush.msra.mxu0 %v468
  %480 = vmatpush.msra.mxu0 %v467
  %481 = vmatpush.msra.mxu0 %v466
  %482 = vmatpush.msra.mxu0 %v465
  %483 = vmatpush.msra.mxu0 %v464
  %484 = vmatpush.msra.mxu0 %v463
  %485 = vmatpush.msra.mxu0 %v462
  %486 = vmatpush.msra.mxu0 %v461
  %487 = vmatpush.msra.mxu0 %v460
  %488 = vmatpush.msra.mxu0 %v459
  %489 = vmatpush.msra.mxu0 %v458
  %490 = vmatmul.f32.gmra.mxu0 %v456
  %v491 = vpop.f32.mrf.mxu0
  %v492 = vadd.f32 0.0, %v491
  %493 = vmatmul.f32.gmra.mxu0 %v457
  %v494 = vpop.f32.mrf.mxu0
  %v495 = vadd.f32 0.0, %v494
  %496 = vdwg.mxu0
  %v497 = vadd.f32 %v447, %v492
  %v498 = vadd.f32 %v450, %v495
  %v499 = vadd.f32 %v497, %v498
  %v500 = vrot.slane %v499, 4
  %v501 = vadd.f32 %v499, %v500
  %v502 = vrot.slane %v501, 2
  %v503 = vadd.f32 %v501, %v502
  %v504 = vrot.slane %v503, 1
  %v505 = vadd.f32 %v503, %v504
  %507 = vrot.lane.b32.xlu0 %v505, 112
  %v508 = vpop.permute.xlu0 %507
  %v510 = vadd.f32 %v505, %v508
  %512 = vrot.lane.b32.xlu0 %v510, 96
  %v513 = vpop.permute.xlu0 %512
  %v515 = vadd.f32 %v510, %v513
  %517 = vrot.lane.b32.xlu0 %v515, 64
  %v518 = vpop.permute.xlu0 %517
  %v520 = vadd.f32 %v515, %v518
  %v521 = vmul.f32 %v497, %v497
  %v522 = vmul.f32 %v498, %v498
  %v523 = vadd.f32 %v521, %v522
  %v524 = vrot.slane %v523, 4
  %v525 = vadd.f32 %v523, %v524
  %v526 = vrot.slane %v525, 2
  %v527 = vadd.f32 %v525, %v526
  %v528 = vrot.slane %v527, 1
  %v529 = vadd.f32 %v527, %v528
  %531 = vrot.lane.b32.xlu0 %v529, 112
  %v532 = vpop.permute.xlu0 %531
  %v534 = vadd.f32 %v529, %v532
  %536 = vrot.lane.b32.xlu0 %v534, 96
  %v537 = vpop.permute.xlu0 %536
  %v539 = vadd.f32 %v534, %v537
  %541 = vrot.lane.b32.xlu0 %v539, 64
  %v542 = vpop.permute.xlu0 %541
  %v544 = vadd.f32 %v539, %v542
  %v545 = vmul.f32 %v520, 0.0078125
  %v546 = vmul.f32 %v544, 0.0078125
  %v547 = vmul.f32 %v545, %v545
  %v548 = vsub.f32 %v546, %v547
  %v549 = vmax.f32 %v548, 0.0
  %v550 = vperm.slane %v545, 0
  %v551 = vsub.f32 %v497, %v550
  %v552 = vsub.f32 %v498, %v550
  %v553 = vld [vmem:[%s4] sm:$0x1]
  %v554 = vadd.f32 %v549, 1e-05
  %v555 = vrsqrt.pop %v554
  %v556 = vmul.f32 %v555, %v554
  %v557 = vmul.f32 %v556, %v555
  %v558 = vmul.f32 0.5, %v557
  %v559 = vsub.f32 1.5, %v558
  %v560 = vmul.f32 %v555, %v559
  %vm561 = vweird.f32 %v554
  %vm562 = vweird.f32 %v555
  %vm563 = vmor %vm561, %vm562
  %v564 = vsel %vm563, %v555, %v560
  %v565 = vmul.f32 %v553, %v564
  %v566 = vperm.slane %v565, 0
  %v567 = vmul.f32 %v551, %v566
  %v568 = vmul.f32 %v552, %v566
  %v569 = vld [vmem:[%s4 + $0x1] sm:$0x1]
  %v570 = vperm.slane %v569, 0
  %v571 = vadd.f32 %v567, %v570
  %v572 = vadd.f32 %v568, %v570
  %v573 = vmax.f32 %v571, 0.0
  %v574 = vmax.f32 %v572, 0.0
  %575 = vst [vmem:[#allocation5] sm:$0xff] %v573
  %576 = vst [vmem:[#allocation5 + $0x8] sm:$0xff] %v574
  %v577 = vld [vmem:[#allocation5] ss:$2 sm:$0xff]
  %s578 = scalar_lea.vmem [#allocation5], 1
  %v579 = vld [vmem:[%s578] ss:$2 sm:$0xff]
  %v580 = vmax.f32 %v577, %v579
  %582 = vrot.lane.b32.xlu0 %v580, 112
  %v583 = vpop.permute.xlu0 %582
  %v585 = vsel %vm254, %v583, 0.0
  %v586 = vmax.f32 %v580, %v585
  %587 = vst [vmem:[#allocation6 + $0x1] sm:$0xff] %v586
  %v588 = vand.u32 %v48, 3
  %v589 = vld [vmem:[#allocation6] sm:$0xff]
  %vm590 = vcmp.ge.s32.totalorder %v588, 1
  %v591 = vsel %vm590, %v589, 0.0
  %v592 = vld [vmem:[%s5] sm:$0xff]
  %v593 = vld [vmem:[%s5 + $0x8] sm:$0xff]
  %v594 = vld [vmem:[%s5 + $0x10] sm:$0xff]
  %v595 = vld [vmem:[%s5 + $0x18] sm:$0xff]
  %v596 = vld [vmem:[%s5 + $0x20] sm:$0xff]
  %v597 = vld [vmem:[%s5 + $0x28] sm:$0xff]
  %v598 = vld [vmem:[%s5 + $0x30] sm:$0xff]
  %v599 = vld [vmem:[%s5 + $0x38] sm:$0xff]
  %v600 = vld [vmem:[%s5 + $0x40] sm:$0xff]
  %v601 = vld [vmem:[%s5 + $0x48] sm:$0xff]
  %v602 = vld [vmem:[%s5 + $0x50] sm:$0xff]
  %v603 = vld [vmem:[%s5 + $0x58] sm:$0xff]
  %v604 = vld [vmem:[%s5 + $0x60] sm:$0xff]
  %v605 = vld [vmem:[%s5 + $0x68] sm:$0xff]
  %v606 = vld [vmem:[%s5 + $0x70] sm:$0xff]
  %v607 = vld [vmem:[%s5 + $0x78] sm:$0xff]
  %v608 = vld [vmem:[#allocation6 + $0x1] sm:$0xff]
  %v609 = vld [vmem:[%s5 + $0x80] sm:$0xff]
  %v610 = vld [vmem:[%s5 + $0x88] sm:$0xff]
  %v611 = vld [vmem:[%s5 + $0x90] sm:$0xff]
  %v612 = vld [vmem:[%s5 + $0x98] sm:$0xff]
  %v613 = vld [vmem:[%s5 + $0xa0] sm:$0xff]
  %v614 = vld [vmem:[%s5 + $0xa8] sm:$0xff]
  %v615 = vld [vmem:[%s5 + $0xb0] sm:$0xff]
  %v616 = vld [vmem:[%s5 + $0xb8] sm:$0xff]
  %v617 = vld [vmem:[%s5 + $0xc0] sm:$0xff]
  %v618 = vld [vmem:[%s5 + $0xc8] sm:$0xff]
  %v619 = vld [vmem:[%s5 + $0xd0] sm:$0xff]
  %v620 = vld [vmem:[%s5 + $0xd8] sm:$0xff]
  %v621 = vld [vmem:[%s5 + $0xe0] sm:$0xff]
  %v622 = vld [vmem:[%s5 + $0xe8] sm:$0xff]
  %v623 = vld [vmem:[%s5 + $0xf0] sm:$0xff]
  %v624 = vld [vmem:[%s5 + $0xf8] sm:$0xff]
  %625 = vmatpush.msra.mxu0 %v624
  %626 = vmatpush.msra.mxu0 %v623
  %627 = vmatpush.msra.mxu0 %v622
  %628 = vmatpush.msra.mxu0 %v621
  %629 = vmatpush.msra.mxu0 %v620
  %630 = vmatpush.msra.mxu0 %v619
  %631 = vmatpush.msra.mxu0 %v618
  %632 = vmatpush.msra.mxu0 %v617
  %633 = vmatpush.msra.mxu0 %v616
  %634 = vmatpush.msra.mxu0 %v615
  %635 = vmatpush.msra.mxu0 %v614
  %636 = vmatpush.msra.mxu0 %v613
  %637 = vmatpush.msra.mxu0 %v612
  %638 = vmatpush.msra.mxu0 %v611
  %639 = vmatpush.msra.mxu0 %v610
  %640 = vmatpush.msra.mxu0 %v609
  %641 = vmatmul.f32.gmra.mxu0 %v608
  %v642 = vpop.f32.mrf.mxu0
  %v643 = vadd.f32 0.0, %v642
  %644 = vdwg.mxu0
  %645 = vmatpush.msra.mxu0 %v607
  %646 = vmatpush.msra.mxu0 %v606
  %647 = vmatpush.msra.mxu0 %v605
  %648 = vmatpush.msra.mxu0 %v604
  %649 = vmatpush.msra.mxu0 %v603
  %650 = vmatpush.msra.mxu0 %v602
  %651 = vmatpush.msra.mxu0 %v601
  %652 = vmatpush.msra.mxu0 %v600
  %653 = vmatpush.msra.mxu0 %v599
  %654 = vmatpush.msra.mxu0 %v598
  %655 = vmatpush.msra.mxu0 %v597
  %656 = vmatpush.msra.mxu0 %v596
  %657 = vmatpush.msra.mxu0 %v595
  %658 = vmatpush.msra.mxu0 %v594
  %659 = vmatpush.msra.mxu0 %v593
  %660 = vmatpush.msra.mxu0 %v592
  %661 = vmatmul.f32.gmra.mxu0 %v591
  %v662 = vpop.f32.mrf.mxu0
  %v663 = vadd.f32 %v643, %v662
  %664 = vdwg.mxu0
  %v665 = vld [vmem:[#allocation6 + $0x2] sm:$0xff]
  %vm666 = vcmp.le.s32.totalorder %v588, 2
  %v667 = vsel %vm666, %v665, 0.0
  %v668 = vld [vmem:[%s5 + $0x100] sm:$0xff]
  %v669 = vld [vmem:[%s5 + $0x108] sm:$0xff]
  %v670 = vld [vmem:[%s5 + $0x110] sm:$0xff]
  %v671 = vld [vmem:[%s5 + $0x118] sm:$0xff]
  %v672 = vld [vmem:[%s5 + $0x120] sm:$0xff]
  %v673 = vld [vmem:[%s5 + $0x128] sm:$0xff]
  %v674 = vld [vmem:[%s5 + $0x130] sm:$0xff]
  %v675 = vld [vmem:[%s5 + $0x138] sm:$0xff]
  %v676 = vld [vmem:[%s5 + $0x140] sm:$0xff]
  %v677 = vld [vmem:[%s5 + $0x148] sm:$0xff]
  %v678 = vld [vmem:[%s5 + $0x150] sm:$0xff]
  %v679 = vld [vmem:[%s5 + $0x158] sm:$0xff]
  %v680 = vld [vmem:[%s5 + $0x160] sm:$0xff]
  %v681 = vld [vmem:[%s5 + $0x168] sm:$0xff]
  %v682 = vld [vmem:[%s5 + $0x170] sm:$0xff]
  %v683 = vld [vmem:[%s5 + $0x178] sm:$0xff]
  %684 = vmatpush.msra.mxu0 %v683
  %685 = vmatpush.msra.mxu0 %v682
  %686 = vmatpush.msra.mxu0 %v681
  %687 = vmatpush.msra.mxu0 %v680
  %688 = vmatpush.msra.mxu0 %v679
  %689 = vmatpush.msra.mxu0 %v678
  %690 = vmatpush.msra.mxu0 %v677
  %691 = vmatpush.msra.mxu0 %v676
  %692 = vmatpush.msra.mxu0 %v675
  %693 = vmatpush.msra.mxu0 %v674
  %694 = vmatpush.msra.mxu0 %v673
  %695 = vmatpush.msra.mxu0 %v672
  %696 = vmatpush.msra.mxu0 %v671
  %697 = vmatpush.msra.mxu0 %v670
  %698 = vmatpush.msra.mxu0 %v669
  %699 = vmatpush.msra.mxu0 %v668
  %700 = vmatmul.f32.gmra.mxu0 %v667
  %v701 = vpop.f32.mrf.mxu0
  %v702 = vadd.f32 0.0, %v701
  %703 = vdwg.mxu0
  %v704 = vadd.f32 %v663, %v702
  %v705 = vsel %vm42, %v704, 0.0
  %v706 = vrot.slane %v705, 4
  %v707 = vadd.f32 %v705, %v706
  %v708 = vrot.slane %v707, 2
  %v709 = vadd.f32 %v707, %v708
  %v710 = vrot.slane %v709, 1
  %v711 = vadd.f32 %v709, %v710
  %713 = vrot.lane.b32.xlu0 %v711, 112
  %v714 = vpop.permute.xlu0 %713
  %716 = vrot.lane.b32.xlu0 %v711, 48
  %v717 = vpop.permute.xlu0 %716
  %vm719 = vcmask 392192
  %v720 = vsel %vm719, %v714, %v717
  %v721 = vadd.f32 %v711, %v720
  %723 = vrot.lane.b32.xlu0 %v721, 96
  %v724 = vpop.permute.xlu0 %723
  %726 = vrot.lane.b32.xlu0 %v721, 32
  %v727 = vpop.permute.xlu0 %726
  %vm729 = vcmask 261120
  %v730 = vsel %vm729, %v724, %v727
  %v731 = vadd.f32 %v721, %v730
  %v732 = vmul.f32 %v704, %v704
  %v733 = vsel %vm42, %v732, 0.0
  %v734 = vrot.slane %v733, 4
  %v735 = vadd.f32 %v733, %v734
  %v736 = vrot.slane %v735, 2
  %v737 = vadd.f32 %v735, %v736
  %v738 = vrot.slane %v737, 1
  %v739 = vadd.f32 %v737, %v738
  %741 = vrot.lane.b32.xlu0 %v739, 112
  %v742 = vpop.permute.xlu0 %741
  %744 = vrot.lane.b32.xlu0 %v739, 48
  %v745 = vpop.permute.xlu0 %744
  %v747 = vsel %vm719, %v742, %v745
  %v748 = vadd.f32 %v739, %v747
  %750 = vrot.lane.b32.xlu0 %v748, 96
  %v751 = vpop.permute.xlu0 %750
  %753 = vrot.lane.b32.xlu0 %v748, 32
  %v754 = vpop.permute.xlu0 %753
  %v756 = vsel %vm729, %v751, %v754
  %v757 = vadd.f32 %v748, %v756
  %v758 = vmul.f32 %v731, 0.03125
  %v759 = vmul.f32 %v757, 0.03125
  %v760 = vmul.f32 %v758, %v758
  %v761 = vsub.f32 %v759, %v760
  %v762 = vmax.f32 %v761, 0.0
  %v763 = vperm.slane %v758, 0
  %v764 = vsub.f32 %v704, %v763
  %v765 = vld [vmem:[%s6] sm:$0x1]
  %v766 = vadd.f32 %v762, 1e-05
  %v767 = vrsqrt.pop %v766
  %v768 = vmul.f32 %v767, %v766
  %v769 = vmul.f32 %v768, %v767
  %v770 = vmul.f32 0.5, %v769
  %v771 = vsub.f32 1.5, %v770
  %v772 = vmul.f32 %v767, %v771
  %vm773 = vweird.f32 %v766
  %vm774 = vweird.f32 %v767
  %vm775 = vmor %vm773, %vm774
  %v776 = vsel %vm775, %v767, %v772
  %v777 = vmul.f32 %v765, %v776
  %v778 = vperm.slane %v777, 0
  %v779 = vmul.f32 %v764, %v778
  %v780 = vld [vmem:[%s6 + $0x1] sm:$0x1]
  %v781 = vperm.slane %v780, 0
  %v782 = vadd.f32 %v779, %v781
  %v783 = vmax.f32 %v782, 0.0
  %784 = vst.msk [vmem:[#allocation7 + $0x1] sm:$0xff] %vm42, %v783
  %v785 = vld [vmem:[#allocation7] sm:$0xff]
  %v786 = vsel %vm590, %v785, 0.0
  %v787 = vld [vmem:[%s7] sm:$0xff]
  %v788 = vld [vmem:[%s7 + $0x8] sm:$0xff]
  %v789 = vld [vmem:[%s7 + $0x10] sm:$0xff]
  %v790 = vld [vmem:[%s7 + $0x18] sm:$0xff]
  %v791 = vld [vmem:[%s7 + $0x20] sm:$0xff]
  %v792 = vld [vmem:[%s7 + $0x28] sm:$0xff]
  %v793 = vld [vmem:[%s7 + $0x30] sm:$0xff]
  %v794 = vld [vmem:[%s7 + $0x38] sm:$0xff]
  %v795 = vld [vmem:[#allocation7 + $0x1] sm:$0xff]
  %v796 = vld [vmem:[%s7 + $0x40] sm:$0xff]
  %v797 = vld [vmem:[%s7 + $0x48] sm:$0xff]
  %v798 = vld [vmem:[%s7 + $0x50] sm:$0xff]
  %v799 = vld [vmem:[%s7 + $0x58] sm:$0xff]
  %v800 = vld [vmem:[%s7 + $0x60] sm:$0xff]
  %v801 = vld [vmem:[%s7 + $0x68] sm:$0xff]
  %v802 = vld [vmem:[%s7 + $0x70] sm:$0xff]
  %v803 = vld [vmem:[%s7 + $0x78] sm:$0xff]
  %v805 = vsel %vm42, %v795, 0
  %807 = vmatpush.msra.mxu0 0.0
  %808 = vmatpush.msra.mxu0 0.0
  %809 = vmatpush.msra.mxu0 0.0
  %810 = vmatpush.msra.mxu0 0.0
  %811 = vmatpush.msra.mxu0 0.0
  %812 = vmatpush.msra.mxu0 0.0
  %813 = vmatpush.msra.mxu0 0.0
  %814 = vmatpush.msra.mxu0 0.0
  %815 = vmatpush.msra.mxu0 %v803
  %816 = vmatpush.msra.mxu0 %v802
  %817 = vmatpush.msra.mxu0 %v801
  %818 = vmatpush.msra.mxu0 %v800
  %819 = vmatpush.msra.mxu0 %v799
  %820 = vmatpush.msra.mxu0 %v798
  %821 = vmatpush.msra.mxu0 %v797
  %822 = vmatpush.msra.mxu0 %v796
  %823 = vmatmul.f32.gmra.mxu0 %v805
  %v824 = vpop.f32.mrf.mxu0
  %v825 = vadd.f32 0.0, %v824
  %826 = vdwg.mxu0
  %v828 = vsel %vm42, %v786, 0
  %830 = vmatpush.msra.mxu0 0.0
  %831 = vmatpush.msra.mxu0 0.0
  %832 = vmatpush.msra.mxu0 0.0
  %833 = vmatpush.msra.mxu0 0.0
  %834 = vmatpush.msra.mxu0 0.0
  %835 = vmatpush.msra.mxu0 0.0
  %836 = vmatpush.msra.mxu0 0.0
  %837 = vmatpush.msra.mxu0 0.0
  %838 = vmatpush.msra.mxu0 %v794
  %839 = vmatpush.msra.mxu0 %v793
  %840 = vmatpush.msra.mxu0 %v792
  %841 = vmatpush.msra.mxu0 %v791
  %842 = vmatpush.msra.mxu0 %v790
  %843 = vmatpush.msra.mxu0 %v789
  %844 = vmatpush.msra.mxu0 %v788
  %845 = vmatpush.msra.mxu0 %v787
  %846 = vmatmul.f32.gmra.mxu0 %v828
  %v847 = vpop.f32.mrf.mxu0
  %v848 = vadd.f32 %v825, %v847
  %849 = vdwg.mxu0
  %v850 = vld [vmem:[#allocation7 + $0x2] sm:$0xff]
  %v851 = vsel %vm666, %v850, 0.0
  %v852 = vld [vmem:[%s7 + $0x80] sm:$0xff]
  %v853 = vld [vmem:[%s7 + $0x88] sm:$0xff]
  %v854 = vld [vmem:[%s7 + $0x90] sm:$0xff]
  %v855 = vld [vmem:[%s7 + $0x98] sm:$0xff]
  %v856 = vld [vmem:[%s7 + $0xa0] sm:$0xff]
  %v857 = vld [vmem:[%s7 + $0xa8] sm:$0xff]
  %v858 = vld [vmem:[%s7 + $0xb0] sm:$0xff]
  %v859 = vld [vmem:[%s7 + $0xb8] sm:$0xff]
  %v861 = vsel %vm42, %v851, 0
  %863 = vmatpush.msra.mxu0 0.0
  %864 = vmatpush.msra.mxu0 0.0
  %865 = vmatpush.msra.mxu0 0.0
  %866 = vmatpush.msra.mxu0 0.0
  %867 = vmatpush.msra.mxu0 0.0
  %868 = vmatpush.msra.mxu0 0.0
  %869 = vmatpush.msra.mxu0 0.0
  %870 = vmatpush.msra.mxu0 0.0
  %871 = vmatpush.msra.mxu0 %v859
  %872 = vmatpush.msra.mxu0 %v858
  %873 = vmatpush.msra.mxu0 %v857
  %874 = vmatpush.msra.mxu0 %v856
  %875 = vmatpush.msra.mxu0 %v855
  %876 = vmatpush.msra.mxu0 %v854
  %877 = vmatpush.msra.mxu0 %v853
  %878 = vmatpush.msra.mxu0 %v852
  %879 = vmatmul.f32.gmra.mxu0 %v861
  %v880 = vpop.f32.mrf.mxu0
  %v881 = vadd.f32 0.0, %v880
  %882 = vdwg.mxu0
  %v883 = vadd.f32 %v848, %v881
  %v884 = vsel %vm42, %v883, 0.0
  %v885 = vrot.slane %v884, 4
  %v886 = vadd.f32 %v884, %v885
  %v887 = vrot.slane %v886, 2
  %v888 = vadd.f32 %v886, %v887
  %v889 = vrot.slane %v888, 1
  %v890 = vadd.f32 %v888, %v889
  %892 = vrot.lane.b32.xlu0 %v890, 112
  %v893 = vpop.permute.xlu0 %892
  %895 = vrot.lane.b32.xlu0 %v890, 48
  %v896 = vpop.permute.xlu0 %895
  %v898 = vsel %vm719, %v893, %v896
  %v899 = vadd.f32 %v890, %v898
  %901 = vrot.lane.b32.xlu0 %v899, 96
  %v902 = vpop.permute.xlu0 %901
  %904 = vrot.lane.b32.xlu0 %v899, 32
  %v905 = vpop.permute.xlu0 %904
  %v907 = vsel %vm729, %v902, %v905
  %v908 = vadd.f32 %v899, %v907
  %v909 = vmul.f32 %v883, %v883
  %v910 = vsel %vm42, %v909, 0.0
  %v911 = vrot.slane %v910, 4
  %v912 = vadd.f32 %v910, %v911
  %v913 = vrot.slane %v912, 2
  %v914 = vadd.f32 %v912, %v913
  %v915 = vrot.slane %v914, 1
  %v916 = vadd.f32 %v914, %v915
  %918 = vrot.lane.b32.xlu0 %v916, 112
  %v919 = vpop.permute.xlu0 %918
  %921 = vrot.lane.b32.xlu0 %v916, 48
  %v922 = vpop.permute.xlu0 %921
  %v924 = vsel %vm719, %v919, %v922
  %v925 = vadd.f32 %v916, %v924
  %927 = vrot.lane.b32.xlu0 %v925, 96
  %v928 = vpop.permute.xlu0 %927
  %930 = vrot.lane.b32.xlu0 %v925, 32
  %v931 = vpop.permute.xlu0 %930
  %v933 = vsel %vm729, %v928, %v931
  %v934 = vadd.f32 %v925, %v933
  %v935 = vmul.f32 %v908, 0.03125
  %v936 = vmul.f32 %v934, 0.03125
  %v937 = vmul.f32 %v935, %v935
  %v938 = vsub.f32 %v936, %v937
  %v939 = vmax.f32 %v938, 0.0
  %v940 = vperm.slane %v935, 0
  %v941 = vsub.f32 %v883, %v940
  %v942 = vld [vmem:[%s8] sm:$0x1]
  %v943 = vadd.f32 %v939, 1e-05
  %v944 = vrsqrt.pop %v943
  %v945 = vmul.f32 %v944, %v943
  %v946 = vmul.f32 %v945, %v944
  %v947 = vmul.f32 0.5, %v946
  %v948 = vsub.f32 1.5, %v947
  %v949 = vmul.f32 %v944, %v948
  %vm950 = vweird.f32 %v943
  %vm951 = vweird.f32 %v944
  %vm952 = vmor %vm950, %vm951
  %v953 = vsel %vm952, %v944, %v949
  %v954 = vmul.f32 %v942, %v953
  %v955 = vperm.slane %v954, 0
  %v956 = vmul.f32 %v941, %v955
  %v957 = vld [vmem:[%s8 + $0x1] sm:$0x1]
  %v958 = vperm.slane %v957, 0
  %v959 = vadd.f32 %v956, %v958
  %v960 = vtanh.pop %v959
  %961 = vst.msk [vmem:[#allocation8] sm:$0xff] %vm42, %v960
  %v962 = vld [vmem:[%s10] sm:$0x1]
  %v964 = vperm.slane %v962, 0
  %v966 = vadd.f32 %v964, 0.0
  %v967 = vld [vmem:[#allocation8] ss:$4 sm:$0x3]
  %v968 = vld [vmem:[%s9] sm:$0xff]
  %v969 = vld [vmem:[%s9 + $0x8] sm:$0xff]
  %v970 = vld [vmem:[%s9 + $0x10] sm:$0xff]
  %v971 = vld [vmem:[%s9 + $0x18] sm:$0xff]
  %v972 = vld [vmem:[%s9 + $0x20] sm:$0xff]
  %v973 = vld [vmem:[%s9 + $0x28] sm:$0xff]
  %v974 = vld [vmem:[%s9 + $0x30] sm:$0xff]
  %v975 = vld [vmem:[%s9 + $0x38] sm:$0xff]
  %v977 = vsel %vm42, %v967, 0
  %979 = vmatpush.msra.mxu0 0.0
  %980 = vmatpush.msra.mxu0 0.0
  %981 = vmatpush.msra.mxu0 0.0
  %982 = vmatpush.msra.mxu0 0.0
  %983 = vmatpush.msra.mxu0 0.0
  %984 = vmatpush.msra.mxu0 0.0
  %985 = vmatpush.msra.mxu0 0.0
  %986 = vmatpush.msra.mxu0 0.0
  %987 = vmatpush.msra.mxu0 %v975
  %988 = vmatpush.msra.mxu0 %v974
  %989 = vmatpush.msra.mxu0 %v973
  %990 = vmatpush.msra.mxu0 %v972
  %991 = vmatpush.msra.mxu0 %v971
  %992 = vmatpush.msra.mxu0 %v970
  %993 = vmatpush.msra.mxu0 %v969
  %994 = vmatpush.msra.mxu0 %v968
  %995 = vmatmul.f32.gmra.mxu0 %v977
  %v996 = vpop.f32.mrf.mxu0
  %v997 = vadd.f32 0.0, %v996
  %998 = vdwg.mxu0
  %v999 = vadd.f32 %v966, %v997
  %s1000 = scalar_lea.vmem [#allocation8], 1
  %v1001 = vld [vmem:[%s1000] ss:$4 sm:$0x3]
  %v1002 = vld [vmem:[%s9 + $0x40] sm:$0xff]
  %v1003 = vld [vmem:[%s9 + $0x48] sm:$0xff]
  %v1004 = vld [vmem:[%s9 + $0x50] sm:$0xff]
  %v1005 = vld [vmem:[%s9 + $0x58] sm:$0xff]
  %v1006 = vld [vmem:[%s9 + $0x60] sm:$0xff]
  %v1007 = vld [vmem:[%s9 + $0x68] sm:$0xff]
  %v1008 = vld [vmem:[%s9 + $0x70] sm:$0xff]
  %v1009 = vld [vmem:[%s9 + $0x78] sm:$0xff]
  %v1011 = vsel %vm42, %v1001, 0
  %1013 = vmatpush.msra.mxu0 0.0
  %1014 = vmatpush.msra.mxu0 0.0
  %1015 = vmatpush.msra.mxu0 0.0
  %1016 = vmatpush.msra.mxu0 0.0
  %1017 = vmatpush.msra.mxu0 0.0
  %1018 = vmatpush.msra.mxu0 0.0
  %1019 = vmatpush.msra.mxu0 0.0
  %1020 = vmatpush.msra.mxu0 0.0
  %1021 = vmatpush.msra.mxu0 %v1009
  %1022 = vmatpush.msra.mxu0 %v1008
  %1023 = vmatpush.msra.mxu0 %v1007
  %1024 = vmatpush.msra.mxu0 %v1006
  %1025 = vmatpush.msra.mxu0 %v1005
  %1026 = vmatpush.msra.mxu0 %v1004
  %1027 = vmatpush.msra.mxu0 %v1003
  %1028 = vmatpush.msra.mxu0 %v1002
  %1029 = vmatmul.f32.gmra.mxu0 %v1011
  %v1030 = vpop.f32.mrf.mxu0
  %v1031 = vadd.f32 0.0, %v1030
  %1032 = vdwg.mxu0
  %v1033 = vadd.f32 %v999, %v1031
  %s1034 = scalar_lea.vmem [#allocation8], 2
  %v1035 = vld [vmem:[%s1034] ss:$4 sm:$0x3]
  %v1036 = vld [vmem:[%s9 + $0x80] sm:$0xff]
  %v1037 = vld [vmem:[%s9 + $0x88] sm:$0xff]
  %v1038 = vld [vmem:[%s9 + $0x90] sm:$0xff]
  %v1039 = vld [vmem:[%s9 + $0x98] sm:$0xff]
  %v1040 = vld [vmem:[%s9 + $0xa0] sm:$0xff]
  %v1041 = vld [vmem:[%s9 + $0xa8] sm:$0xff]
  %v1042 = vld [vmem:[%s9 + $0xb0] sm:$0xff]
  %v1043 = vld [vmem:[%s9 + $0xb8] sm:$0xff]
  %v1045 = vsel %vm42, %v1035, 0
  %1047 = vmatpush.msra.mxu0 0.0
  %1048 = vmatpush.msra.mxu0 0.0
  %1049 = vmatpush.msra.mxu0 0.0
  %1050 = vmatpush.msra.mxu0 0.0
  %1051 = vmatpush.msra.mxu0 0.0
  %1052 = vmatpush.msra.mxu0 0.0
  %1053 = vmatpush.msra.mxu0 0.0
  %1054 = vmatpush.msra.mxu0 0.0
  %1055 = vmatpush.msra.mxu0 %v1043
  %1056 = vmatpush.msra.mxu0 %v1042
  %1057 = vmatpush.msra.mxu0 %v1041
  %1058 = vmatpush.msra.mxu0 %v1040
  %1059 = vmatpush.msra.mxu0 %v1039
  %1060 = vmatpush.msra.mxu0 %v1038
  %1061 = vmatpush.msra.mxu0 %v1037
  %1062 = vmatpush.msra.mxu0 %v1036
  %1063 = vmatmul.f32.gmra.mxu0 %v1045
  %v1064 = vpop.f32.mrf.mxu0
  %v1065 = vadd.f32 0.0, %v1064
  %1066 = vdwg.mxu0
  %v1067 = vadd.f32 %v1033, %v1065
  %s1068 = scalar_lea.vmem [#allocation8], 3
  %v1069 = vld [vmem:[%s1068] ss:$4 sm:$0x3]
  %v1070 = vld [vmem:[%s9 + $0xc0] sm:$0xff]
  %v1071 = vld [vmem:[%s9 + $0xc8] sm:$0xff]
  %v1072 = vld [vmem:[%s9 + $0xd0] sm:$0xff]
  %v1073 = vld [vmem:[%s9 + $0xd8] sm:$0xff]
  %v1074 = vld [vmem:[%s9 + $0xe0] sm:$0xff]
  %v1075 = vld [vmem:[%s9 + $0xe8] sm:$0xff]
  %v1076 = vld [vmem:[%s9 + $0xf0] sm:$0xff]
  %v1077 = vld [vmem:[%s9 + $0xf8] sm:$0xff]
  %v1079 = vsel %vm42, %v1069, 0
  %1081 = vmatpush.msra.mxu0 0.0
  %1082 = vmatpush.msra.mxu0 0.0
  %1083 = vmatpush.msra.mxu0 0.0
  %1084 = vmatpush.msra.mxu0 0.0
  %1085 = vmatpush.msra.mxu0 0.0
  %1086 = vmatpush.msra.mxu0 0.0
  %1087 = vmatpush.msra.mxu0 0.0
  %1088 = vmatpush.msra.mxu0 0.0
  %1089 = vmatpush.msra.mxu0 %v1077
  %1090 = vmatpush.msra.mxu0 %v1076
  %1091 = vmatpush.msra.mxu0 %v1075
  %1092 = vmatpush.msra.mxu0 %v1074
  %1093 = vmatpush.msra.mxu0 %v1073
  %1094 = vmatpush.msra.mxu0 %v1072
  %1095 = vmatpush.msra.mxu0 %v1071
  %1096 = vmatpush.msra.mxu0 %v1070
  %1097 = vmatmul.f32.gmra.mxu0 %v1079
  %v1098 = vpop.f32.mrf.mxu0
  %v1099 = vadd.f32 0.0, %v1098
  %1100 = vdwg.mxu0
  %v1101 = vadd.f32 %v1067, %v1099
  %vm1102 = vcmask 517120
  %1103 = vst.msk [vmem:[%s11] sm:$0x3] %vm1102, %v1101
  // Predicated region
  $region46: #{crafter_encoder_forward.1} parent=0 // pred_check
    _
  $region47: #{crafter_encoder_forward.1} parent=0 // pred_check_branch
    %1105 = sbr.rel (0) target = $region49
  $region48: #{crafter_encoder_forward.1} parent=0 // pred_region
    _
  $region49: #{crafter_encoder_forward.1} parent=0 // pred_fallthru
    _
  // Predicated region
  $region50: #{crafter_encoder_forward.1} parent=0 // pred_check
    _
  $region51: #{crafter_encoder_forward.1} parent=0 // pred_check_branch
    %1107 = sbr.rel (0) target = $region53
  $region52: #{crafter_encoder_forward.1} parent=0 // pred_region
    _
  $region53: #{crafter_encoder_forward.1} parent=0 // pred_fallthru
    _

</llo_original>
